<compile_context>
chip_gen: v7x
topology: tpu7x:2x2x1
jax: 0.10.0
libtpu: 0.0.40
codegen_flags: <defaults>
</compile_context>

<pallas_src>
import functools

import jax
import jax.numpy as jnp
from jax.experimental import pallas as pl
from jax.experimental.pallas import tpu as pltpu


def _round_up(a, b):
    return (a + b - 1) // b * b


# --------------------- pass 1: conv matmul + BN statistics ---------------------


def _conv_stats_kernel(w_ref, p_ref, g_ref, b_ref,
                       y_ref, scale_ref, shift_ref,
                       sum_acc, sq_acc, *, m_true, eps):
    i = pl.program_id(0)

    @pl.when(i == 0)
    def _():
        sum_acc[...] = jnp.zeros_like(sum_acc)
        sq_acc[...] = jnp.zeros_like(sq_acc)

    # Conv3d as a single MXU matmul: (Cout_p, Kp) bf16 @ (Kp, TM) bf16 -> f32.
    y = jnp.dot(w_ref[...], p_ref[...], preferred_element_type=jnp.float32)
    y_ref[...] = y                                   # lane-dense store (M on lanes)

    # Per-channel partial sums: lane-axis reduce (XLU), accumulated in VMEM.
    sum_acc[...] += jnp.sum(y, axis=1, keepdims=True)
    sq_acc[...] += jnp.sum(y * y, axis=1, keepdims=True)

    @pl.when(i == pl.num_programs(0) - 1)
    def _():
        inv_m = 1.0 / m_true
        mean = sum_acc[...] * inv_m
        var = sq_acc[...] * inv_m - mean * mean      # biased variance (BN training)
        scale = g_ref[...] * jax.lax.rsqrt(var + eps)
        scale_ref[...] = scale
        shift_ref[...] = b_ref[...] - mean * scale


# --------------------- pass 2: fused scale/shift + ELU -------------------------


def _bn_elu_kernel(y_ref, scale_ref, shift_ref, o_ref):
    z = y_ref[...] * scale_ref[...] + shift_ref[...]         # BN folded to one FMA
    # ELU (alpha=1): z if z>0 else expm1(z)  (exp(z)-1 keeps lowering minimal;
    # |diff vs expm1| <= ~1 ulp of 1 on the negative branch)
    o_ref[...] = jnp.where(z > 0, z, jnp.exp(z) - 1.0)


# ------------------------------- wrapper ---------------------------------------


def single_conv3d(x_ncdhw, weight_oidhw, gamma, beta, *, pad=1, eps=1e-5):
    """Forward of SingleConv3d. x: (N, Cin, D, H, W), weight: (Cout, Cin, k, k, k)."""
    N, Cin, D, H, W = x_ncdhw.shape
    Cout, _, k, _, _ = weight_oidhw.shape
    M = N * D * H * W
    K = k * k * k * Cin

    LANE = 128
    Cout_p = _round_up(Cout, 16)                 # sublane-friendly for bf16 LHS
    K_p = _round_up(K, LANE)                     # fill the contraction lane tile
    TM = min(2048, _round_up(M, LANE))           # ~0.5 MB bf16 tile, fits every gen
    M_p = _round_up(M, TM)
    G = M_p // TM

    # ---- glue (plain JAX): spatial pad + im2col, built directly in (K, M) layout
    # so the big M axis lands on lanes inside the kernel. Rows are tap-major,
    # channel-minor to match the reshaped weight.
    x = x_ncdhw.astype(jnp.float32)
    xp = jnp.pad(x, ((0, 0), (0, 0), (pad, pad), (pad, pad), (pad, pad)))
    xp = jnp.transpose(xp, (1, 0, 2, 3, 4))      # (Cin, N, Dp, Hp, Wp)
    rows = []
    for kd in range(k):
        for kh in range(k):
            for kw in range(k):
                rows.append(xp[:, :, kd:kd + D, kh:kh + H, kw:kw + W].reshape(Cin, M))
    patches_t = jnp.concatenate(rows, axis=0)                       # (K, M) f32
    patches_t = jnp.pad(patches_t, ((0, K_p - K), (0, M_p - M)))
    patches_t = patches_t.astype(jnp.bfloat16)

    # weight (Cout,Cin,kd,kh,kw) -> (Cout, K) tap-major / channel-minor -> pad -> bf16
    w_t = jnp.transpose(weight_oidhw, (0, 2, 3, 4, 1)).reshape(Cout, K)
    w_t = jnp.pad(w_t.astype(jnp.float32), ((0, Cout_p - Cout), (0, K_p - K)))
    w_t = w_t.astype(jnp.bfloat16)

    g = jnp.pad(gamma.astype(jnp.float32).reshape(Cout, 1), ((0, Cout_p - Cout), (0, 0)))
    b = jnp.pad(beta.astype(jnp.float32).reshape(Cout, 1), ((0, Cout_p - Cout), (0, 0)))

    vmem_limit = 32 * 1024 * 1024

    # ---------------- pass 1: conv + stats (sequential over M tiles) ----------
    kernel1 = functools.partial(_conv_stats_kernel, m_true=float(M), eps=float(eps))
    cost1 = pl.CostEstimate(
        flops=2 * M_p * K_p * Cout_p,
        transcendentals=0,
        bytes_accessed=K_p * M_p * 2 + Cout_p * K_p * 2 + Cout_p * M_p * 4)

    y_t, scale, shift = pl.pallas_call(
        kernel1,
        out_shape=(jax.ShapeDtypeStruct((Cout_p, M_p), jnp.float32),
                   jax.ShapeDtypeStruct((Cout_p, 1), jnp.float32),
                   jax.ShapeDtypeStruct((Cout_p, 1), jnp.float32)),
        grid_spec=pltpu.PrefetchScalarGridSpec(
            num_scalar_prefetch=0,
            grid=(G,),
            in_specs=[
                pl.BlockSpec((Cout_p, K_p), lambda i: (0, 0)),   # weights (resident)
                pl.BlockSpec((K_p, TM), lambda i: (0, i)),       # patches^T tile
                pl.BlockSpec((Cout_p, 1), lambda i: (0, 0)),     # gamma
                pl.BlockSpec((Cout_p, 1), lambda i: (0, 0)),     # beta
            ],
            out_specs=[
                pl.BlockSpec((Cout_p, TM), lambda i: (0, i)),    # y^T tile (lane-dense)
                pl.BlockSpec((Cout_p, 1), lambda i: (0, 0)),     # scale (last step)
                pl.BlockSpec((Cout_p, 1), lambda i: (0, 0)),     # shift (last step)
            ],
            scratch_shapes=[pltpu.VMEM((Cout_p, 1), jnp.float32),
                            pltpu.VMEM((Cout_p, 1), jnp.float32)]),
        compiler_params=pltpu.CompilerParams(
            dimension_semantics=("arbitrary",),                   # stats accumulation
            vmem_limit_bytes=vmem_limit),
        cost_estimate=cost1,
    )(w_t, patches_t, g, b)

    # ---------------- pass 2: normalize + ELU (parallel over M tiles) ---------
    cost2 = pl.CostEstimate(
        flops=2 * Cout_p * M_p,
        transcendentals=Cout_p * M_p,
        bytes_accessed=2 * Cout_p * M_p * 4)

    out_t = pl.pallas_call(
        _bn_elu_kernel,
        out_shape=jax.ShapeDtypeStruct((Cout_p, M_p), jnp.float32),
        grid_spec=pltpu.PrefetchScalarGridSpec(
            num_scalar_prefetch=0,
            grid=(G,),
            in_specs=[
                pl.BlockSpec((Cout_p, TM), lambda i: (0, i)),
                pl.BlockSpec((Cout_p, 1), lambda i: (0, 0)),
                pl.BlockSpec((Cout_p, 1), lambda i: (0, 0)),
            ],
            out_specs=pl.BlockSpec((Cout_p, TM), lambda i: (0, i))),
        compiler_params=pltpu.CompilerParams(
            dimension_semantics=("parallel",),                    # 2 TCs on v7x
            vmem_limit_bytes=vmem_limit),
        cost_estimate=cost2,
    )(y_t, scale, shift)

    # drop padding, back to PyTorch NCDHW
    out = out_t[:Cout, :M].reshape(Cout, N, D, H, W)
    return jnp.transpose(out, (1, 0, 2, 3, 4))


# ------------------------------- reference -------------------------------------


def _reference(x, w, gamma, beta, eps=1e-5):
    """Pure-JAX f32 reference: Conv3d -> BatchNorm3d(train) -> ELU."""
    y = jax.lax.conv_general_dilated(
        x.astype(jnp.float32), w.astype(jnp.float32),
        window_strides=(1, 1, 1), padding=[(1, 1)] * 3,
        dimension_numbers=('NCDHW', 'OIDHW', 'NCDHW'),
        precision=jax.lax.Precision.HIGHEST)
    mean = jnp.mean(y, axis=(0, 2, 3, 4), keepdims=True)
    var = jnp.mean((y - mean) ** 2, axis=(0, 2, 3, 4), keepdims=True)
    y = (y - mean) * jax.lax.rsqrt(var + eps)
    y = y * gamma.reshape(1, -1, 1, 1, 1) + beta.reshape(1, -1, 1, 1, 1)
    return jnp.where(y > 0, y, jnp.expm1(y))


if __name__ == "__main__":
    # SingleConv3d(in_ch=4, out_ch=8, size=3, pad=1, act=ELU)
    N, Cin, Cout, S, k = 2, 4, 8, 16, 3

    key = jax.random.PRNGKey(0)
    kx, kw = jax.random.split(key)
    x = jax.random.normal(kx, (N, Cin, S, S, S), dtype=jnp.float32)
    weight = 0.1 * jax.random.normal(kw, (Cout, Cin, k, k, k), dtype=jnp.float32)
    gamma = jnp.ones((Cout,), dtype=jnp.float32)      # BatchNorm3d default init
    beta = jnp.zeros((Cout,), dtype=jnp.float32)

    out = jax.block_until_ready(single_conv3d(x, weight, gamma, beta))
    assert out.shape == (N, Cout, S, S, S), out.shape

    # Strict check: reference fed the same bf16-rounded operands (isolates the
    # kernel's conv/BN/ELU logic from the intentional bf16-MXU operand cast).
    x_b = x.astype(jnp.bfloat16).astype(jnp.float32)
    w_b = weight.astype(jnp.bfloat16).astype(jnp.float32)
    ref_b = jax.block_until_ready(_reference(x_b, w_b, gamma, beta))
    err_b = float(jnp.max(jnp.abs(out - ref_b)))
    assert jnp.allclose(out, ref_b, atol=2e-3, rtol=2e-3), err_b

    # Loose sanity bound vs the full-f32 reference (bf16 operand rounding is the
    # intended precision/throughput tradeoff for the MXU).
    ref_f = jax.block_until_ready(_reference(x, weight, gamma, beta))
    err_f = float(jnp.max(jnp.abs(out - ref_f)))
    assert jnp.allclose(out, ref_f, atol=5e-2, rtol=5e-2), err_f

    print("KERNEL_OK")
</pallas_src>

<mosaic_0001>
module attributes {stable_mosaic.version = 11 : i64} {
  func.func @_conv_stats_kernel(%arg0: i32, %arg1: memref<16x128xbf16, #tpu.memory_space<vmem>>, %arg2: memref<128x2048xbf16, #tpu.memory_space<vmem>>, %arg3: memref<16x1xf32, #tpu.memory_space<vmem>>, %arg4: memref<16x1xf32, #tpu.memory_space<vmem>>, %arg5: memref<16x2048xf32, #tpu.memory_space<vmem>>, %arg6: memref<16x1xf32, #tpu.memory_space<vmem>>, %arg7: memref<16x1xf32, #tpu.memory_space<vmem>>, %arg8: memref<16x1xf32, #tpu.memory_space<vmem>>, %arg9: memref<16x1xf32, #tpu.memory_space<vmem>>) attributes {dimension_semantics = [#tpu.dimension_semantics<arbitrary>], iteration_bounds = array<i64: 4>, scalar_prefetch = 0 : i64, scratch_operands = 2 : i64, tpu.core_type = #tpu.core_type<tc>, window_params = [{pipeline_mode = #tpu.pipeline_mode<synchronous>, transform_indices = @transform_0, window_bounds = array<i64: 16, 128>}, {transform_indices = @transform_1, window_bounds = array<i64: 128, 2048>}, {pipeline_mode = #tpu.pipeline_mode<synchronous>, transform_indices = @transform_2, window_bounds = array<i64: 16, 1>}, {pipeline_mode = #tpu.pipeline_mode<synchronous>, transform_indices = @transform_3, window_bounds = array<i64: 16, 1>}, {transform_indices = @transform_4, window_bounds = array<i64: 16, 2048>}, {pipeline_mode = #tpu.pipeline_mode<synchronous>, transform_indices = @transform_5, window_bounds = array<i64: 16, 1>}, {pipeline_mode = #tpu.pipeline_mode<synchronous>, transform_indices = @transform_6, window_bounds = array<i64: 16, 1>}]} {
    %c0_i32 = arith.constant 0 : i32
    %0 = arith.cmpi eq, %arg0, %c0_i32 : i32
    %1 = arith.extui %0 : i1 to i32
    %c0_i32_0 = arith.constant 0 : i32
    %2 = arith.cmpi ne, %1, %c0_i32_0 : i32
    scf.if %2 {
      %cst_17 = arith.constant 0.000000e+00 : f32
      %21 = vector.broadcast %cst_17 : f32 to vector<16x1xf32>
      %c0_18 = arith.constant 0 : index
      %c0_19 = arith.constant 0 : index
      %22 = vector.load %arg8[%c0_18, %c0_19] : memref<16x1xf32, #tpu.memory_space<vmem>>, vector<16x1xf32>
      tpu.vector_store %arg8[%c0_18, %c0_19], %21 {strides = array<i32>} : memref<16x1xf32, #tpu.memory_space<vmem>>, vector<16x1xf32>,
      %cst_20 = arith.constant 0.000000e+00 : f32
      %23 = vector.broadcast %cst_20 : f32 to vector<16x1xf32>
      %c0_21 = arith.constant 0 : index
      %c0_22 = arith.constant 0 : index
      %24 = vector.load %arg9[%c0_21, %c0_22] : memref<16x1xf32, #tpu.memory_space<vmem>>, vector<16x1xf32>
      tpu.vector_store %arg9[%c0_21, %c0_22], %23 {strides = array<i32>} : memref<16x1xf32, #tpu.memory_space<vmem>>, vector<16x1xf32>,
    } else {
    }
    %c0 = arith.constant 0 : index
    %c0_1 = arith.constant 0 : index
    %3 = vector.load %arg1[%c0, %c0_1] : memref<16x128xbf16, #tpu.memory_space<vmem>>, vector<16x128xbf16>
    %c0_2 = arith.constant 0 : index
    %c0_3 = arith.constant 0 : index
    %4 = vector.load %arg2[%c0_2, %c0_3] : memref<128x2048xbf16, #tpu.memory_space<vmem>>, vector<128x2048xbf16>
    %cst = arith.constant dense<0.000000e+00> : vector<16x2048xf32>
    %5 = tpu.matmul %3, %4, %cst {dimension_numbers = #tpu.dot_dimension_numbers<[1], [0], [0], [1], [0, 0, 1, 1], [], []>} : vector<16x128xbf16>, vector<128x2048xbf16>, vector<16x2048xf32> -> vector<16x2048xf32>
    %c0_4 = arith.constant 0 : index
    %c0_5 = arith.constant 0 : index
    %6 = vector.load %arg5[%c0_4, %c0_5] : memref<16x2048xf32, #tpu.memory_space<vmem>>, vector<16x2048xf32>
    tpu.vector_store %arg5[%c0_4, %c0_5], %5 {strides = array<i32>} : memref<16x2048xf32, #tpu.memory_space<vmem>>, vector<16x2048xf32>,
    %c0_6 = arith.constant 0 : index
    %c0_7 = arith.constant 0 : index
    %7 = vector.load %arg8[%c0_6, %c0_7] : memref<16x1xf32, #tpu.memory_space<vmem>>, vector<16x1xf32>
    %cst_8 = arith.constant dense<0.000000e+00> : vector<16xf32>
    %8 = vector.multi_reduction <add>, %5, %cst_8 [1] : vector<16x2048xf32> to vector<16xf32>
    %9 = vector.shape_cast %8 : vector<16xf32> to vector<16x1xf32>
    %10 = arith.addf %7, %9 : vector<16x1xf32>
    %c0_9 = arith.constant 0 : index
    %c0_10 = arith.constant 0 : index
    %11 = vector.load %arg8[%c0_9, %c0_10] : memref<16x1xf32, #tpu.memory_space<vmem>>, vector<16x1xf32>
    tpu.vector_store %arg8[%c0_9, %c0_10], %10 {strides = array<i32>} : memref<16x1xf32, #tpu.memory_space<vmem>>, vector<16x1xf32>,
    %c0_11 = arith.constant 0 : index
    %c0_12 = arith.constant 0 : index
    %12 = vector.load %arg9[%c0_11, %c0_12] : memref<16x1xf32, #tpu.memory_space<vmem>>, vector<16x1xf32>
    %13 = arith.mulf %5, %5 : vector<16x2048xf32>
    %cst_13 = arith.constant dense<0.000000e+00> : vector<16xf32>
    %14 = vector.multi_reduction <add>, %13, %cst_13 [1] : vector<16x2048xf32> to vector<16xf32>
    %15 = vector.shape_cast %14 : vector<16xf32> to vector<16x1xf32>
    %16 = arith.addf %12, %15 : vector<16x1xf32>
    %c0_14 = arith.constant 0 : index
    %c0_15 = arith.constant 0 : index
    %17 = vector.load %arg9[%c0_14, %c0_15] : memref<16x1xf32, #tpu.memory_space<vmem>>, vector<16x1xf32>
    tpu.vector_store %arg9[%c0_14, %c0_15], %16 {strides = array<i32>} : memref<16x1xf32, #tpu.memory_space<vmem>>, vector<16x1xf32>,
    %c3_i32 = arith.constant 3 : i32
    %18 = arith.cmpi eq, %arg0, %c3_i32 : i32
    %19 = arith.extui %18 : i1 to i32
    %c0_i32_16 = arith.constant 0 : i32
    %20 = arith.cmpi ne, %19, %c0_i32_16 : i32
    scf.if %20 {
      %c0_17 = arith.constant 0 : index
      %c0_18 = arith.constant 0 : index
      %21 = vector.load %arg8[%c0_17, %c0_18] : memref<16x1xf32, #tpu.memory_space<vmem>>, vector<16x1xf32>
      %cst_19 = arith.constant 1.22070313E-4 : f32
      %22 = vector.broadcast %cst_19 : f32 to vector<16x1xf32>
      %23 = arith.mulf %21, %22 : vector<16x1xf32>
      %c0_20 = arith.constant 0 : index
      %c0_21 = arith.constant 0 : index
      %24 = vector.load %arg9[%c0_20, %c0_21] : memref<16x1xf32, #tpu.memory_space<vmem>>, vector<16x1xf32>
      %cst_22 = arith.constant 1.22070313E-4 : f32
      %25 = vector.broadcast %cst_22 : f32 to vector<16x1xf32>
      %26 = arith.mulf %24, %25 : vector<16x1xf32>
      %27 = arith.mulf %23, %23 : vector<16x1xf32>
      %28 = arith.subf %26, %27 : vector<16x1xf32>
      %c0_23 = arith.constant 0 : index
      %c0_24 = arith.constant 0 : index
      %29 = vector.load %arg3[%c0_23, %c0_24] : memref<16x1xf32, #tpu.memory_space<vmem>>, vector<16x1xf32>
      %cst_25 = arith.constant 9.99999974E-6 : f32
      %30 = vector.broadcast %cst_25 : f32 to vector<16x1xf32>
      %31 = arith.addf %28, %30 : vector<16x1xf32>
      %32 = math.rsqrt %31 : vector<16x1xf32>
      %33 = arith.mulf %29, %32 : vector<16x1xf32>
      %c0_26 = arith.constant 0 : index
      %c0_27 = arith.constant 0 : index
      %34 = vector.load %arg6[%c0_26, %c0_27] : memref<16x1xf32, #tpu.memory_space<vmem>>, vector<16x1xf32>
      tpu.vector_store %arg6[%c0_26, %c0_27], %33 {strides = array<i32>} : memref<16x1xf32, #tpu.memory_space<vmem>>, vector<16x1xf32>,
      %c0_28 = arith.constant 0 : index
      %c0_29 = arith.constant 0 : index
      %35 = vector.load %arg4[%c0_28, %c0_29] : memref<16x1xf32, #tpu.memory_space<vmem>>, vector<16x1xf32>
      %36 = arith.mulf %23, %33 : vector<16x1xf32>
      %37 = arith.subf %35, %36 : vector<16x1xf32>
      %c0_30 = arith.constant 0 : index
      %c0_31 = arith.constant 0 : index
      %38 = vector.load %arg7[%c0_30, %c0_31] : memref<16x1xf32, #tpu.memory_space<vmem>>, vector<16x1xf32>
      tpu.vector_store %arg7[%c0_30, %c0_31], %37 {strides = array<i32>} : memref<16x1xf32, #tpu.memory_space<vmem>>, vector<16x1xf32>,
    } else {
    }
    return
  }
  func.func @transform_0(%arg0: i32) -> (i32, i32) {
    %c0_i32 = arith.constant 0 : i32
    %c0_i32_0 = arith.constant 0 : i32
    %c0_i32_1 = arith.constant 0 : i32
    return %c0_i32, %c0_i32_0 : i32, i32
  }
  func.func @transform_1(%arg0: i32) -> (i32, i32) {
    %c0_i32 = arith.constant 0 : i32
    %c0_i32_0 = arith.constant 0 : i32
    return %c0_i32, %arg0 : i32, i32
  }
  func.func @transform_2(%arg0: i32) -> (i32, i32) {
    %c0_i32 = arith.constant 0 : i32
    %c0_i32_0 = arith.constant 0 : i32
    %c0_i32_1 = arith.constant 0 : i32
    return %c0_i32, %c0_i32_0 : i32, i32
  }
  func.func @transform_3(%arg0: i32) -> (i32, i32) {
    %c0_i32 = arith.constant 0 : i32
    %c0_i32_0 = arith.constant 0 : i32
    %c0_i32_1 = arith.constant 0 : i32
    return %c0_i32, %c0_i32_0 : i32, i32
  }
  func.func @transform_4(%arg0: i32) -> (i32, i32) {
    %c0_i32 = arith.constant 0 : i32
    %c0_i32_0 = arith.constant 0 : i32
    return %c0_i32, %arg0 : i32, i32
  }
  func.func @transform_5(%arg0: i32) -> (i32, i32) {
    %c0_i32 = arith.constant 0 : i32
    %c0_i32_0 = arith.constant 0 : i32
    %c0_i32_1 = arith.constant 0 : i32
    return %c0_i32, %c0_i32_0 : i32, i32
  }
  func.func @transform_6(%arg0: i32) -> (i32, i32) {
    %c0_i32 = arith.constant 0 : i32
    %c0_i32_0 = arith.constant 0 : i32
    %c0_i32_1 = arith.constant 0 : i32
    return %c0_i32, %c0_i32_0 : i32, i32
  }
}

</mosaic_0001>

<llo_original>
// kernel: tpu_custom_call.1
$region0: #{tpu_custom_call.1}
  #allocation0 [shape = 'u32[]', space=smem, size = 0x4, offset = 0x4, fixed_abs, tag = 'smem constant byte address 0x4 - core index']
  #allocation1 [shape = 'u32[144,128]{1,0:T(1,128)}', space=vmem, size = 0x12000, scoped, tag = 'internal scratch']
  #allocation2 [shape = 'f32[16,1]{1,0:T(8,128)}', space=vmem, size = 0x2000, scoped, tag = 'scratch operand']
  #allocation3 [shape = 'f32[16,1]{1,0:T(8,128)}', space=vmem, size = 0x2000, scoped, tag = 'scratch operand']
  %s0 = inlined_call_operand.hbm [shape: bf16[16,128], index: 0, kind: input, shape index: {}]
  %s1 = inlined_call_operand.hbm [shape: bf16[128,8192], index: 1, kind: input, shape index: {}]
  %s2 = inlined_call_operand.vmem [shape: f32[16,1], index: 2, kind: input, shape index: {}]
  %s3 = inlined_call_operand.vmem [shape: f32[16,1], index: 3, kind: input, shape index: {}]
  %s4 = inlined_call_operand.hbm [shape: f32[16,8192], index: 4, kind: output, shape index: {0}]
  %s5 = inlined_call_operand.vmem [shape: f32[16,1], index: 5, kind: output, shape index: {1}]
  %s6 = inlined_call_operand.vmem [shape: f32[16,1], index: 6, kind: output, shape index: {2}]
  %7 = xla_tuple %s4, %s5, %s6
  %s8 = sld [smem:[#allocation0]]
  $region81: #{tpu_custom_call.1} parent=0
    _
  %s10 = ssub.s32 1, %s8
  %s11 = scalar_select 0, %s10, %s8
  $region1: #{tpu_custom_call.1} parent=0
    #allocation4 [shape = 'u8[4096]{0}', space=vmem, size = 0x1000, scoped, tag = 'input window, operand 0, single buffered']
    #allocation5 [shape = 's32[2]{0}', space=sflag, size = 0x8, scoped, tag = 'scoped memory for tpu_custom_call.1']
    #allocation6 [shape = 's32[2]{0}', space=sflag, size = 0x8, scoped, tag = 'scoped memory for tpu_custom_call.1']
    #allocation7 [shape = 'u8[1048576]{0}', space=vmem, size = 0x100000, scoped, tag = 'input window, operand 1']
    #allocation8 [shape = 's32[2]{0}', space=sflag, size = 0x8, scoped, tag = 'scoped memory for tpu_custom_call.1']
    #allocation9 [shape = 'u8[262144]{0}', space=vmem, size = 0x40000, scoped, tag = 'output window, operand 0']
    %12 = vsyncpa [#allocation5], 0
    %13 = vsyncpa [#allocation8], 0
    %s14 = scalar_lea.sflag [#allocation8], 1
    %15 = vsyncpa %s14, 0
    %16 = vsyncpa [#allocation6], 0
    %s17 = scalar_lea.sflag [#allocation6], 1
    %18 = vsyncpa %s17, 0
    loop: start=0, step=1, limit=6
    $region2: #{tpu_custom_call.1} parent=1 // loop_pre_header
      _
    $region3: #{tpu_custom_call.1} parent=1 // loop_header
      %s20 = sphi 0, %s24
      %p21 = scmp.ge.s32.totalorder %s20, 6
      %s28 = sphi 0, %s28
      %s30 = sphi 0, %s28
      %s31 = sphi 0, %s30
      %s45 = sphi 0, %s31
      %s51 = sphi 0, %s53
      %s54 = sphi 0, %s51
      %s55 = sphi 0, %s54
      %s71 = sphi 0, %s55
      %s75 = sphi 0, %s75
      %s77 = sphi 0, %s75
      %s78 = sphi 0, %s77
      %s92 = sphi 0, %s78
      %s96 = sphi 0, %s96
      %s98 = sphi 0, %s96
      %s99 = sphi 0, %s98
      %s113 = sphi 0, %s99
      %s119 = sphi 0, %s121
      %s122 = sphi 0, %s119
      %s123 = sphi 0, %s122
      %s139 = sphi 0, %s123
      %s143 = sphi 0, %s143
      %s145 = sphi 0, %s143
      %s146 = sphi 0, %s145
      %s160 = sphi 0, %s146
      %s164 = sphi 0, %s164
      %s166 = sphi 0, %s164
      %s167 = sphi 0, %s166
      %s181 = sphi 0, %s167
    $region4: #{tpu_custom_call.1} parent=1 // loop_header_branch
      %23 = sbr.rel (%p21) target = $region8
    $region5: #{tpu_custom_call.1} parent=1 // loop_body
      %s25 = ssub.s32 %s20, 1
      %s26 = ssub.s32 %s20, 2
      %s27 = sadd.s32 %s20, 1
      %s29 = sadd.s32 %s28, 1
      %p32 = scmp.eq.s32.totalorder %s20, 3
      %p33 = scmp.ne.s32.totalorder %s28, %s30
      %p34 = scmp.eq.s32.totalorder %s20, 0
      %p35 = por %p33, %p34
      %p36 = scmp.ne.s32.totalorder %s28, %s30
      %p37 = scmp.eq.s32.totalorder %s25, 3
      %p38 = por %p36, %p37
      %p39 = scmp.ne.s32.totalorder %s30, %s31
      %p40 = scmp.eq.s32.totalorder %s25, 0
      %p41 = por %p39, %p40
      %p42 = scmp.ne.s32.totalorder %s30, %s31
      %p43 = scmp.eq.s32.totalorder %s26, 3
      %p44 = por %p42, %p43
      %p46 = scmp.ne.s32.totalorder %s31, %s45
      %p47 = scmp.eq.s32.totalorder %s26, 0
      %p48 = por %p46, %p47
      %s49 = ssub.s32 %s20, %s27
      %p50 = scmp.eq.s32.totalorder %s49, 0
      %s52 = sadd.s32 %s51, 1
      %s53 = scalar_select %p50, %s51, %s52
      %p56 = pneg %p50
      %p57 = scmp.eq.s32.totalorder %s20, 3
      %p58 = por %p56, %p57
      %p59 = scmp.ne.s32.totalorder %s51, %s54
      %p60 = scmp.eq.s32.totalorder %s20, 0
      %p61 = por %p59, %p60
      %p62 = scmp.ne.s32.totalorder %s51, %s54
      %p63 = scmp.eq.s32.totalorder %s25, 3
      %p64 = por %p62, %p63
      %p65 = scmp.ne.s32.totalorder %s54, %s55
      %p66 = scmp.eq.s32.totalorder %s25, 0
      %p67 = por %p65, %p66
      %p68 = scmp.ne.s32.totalorder %s54, %s55
      %p69 = scmp.eq.s32.totalorder %s26, 3
      %p70 = por %p68, %p69
      %p72 = scmp.ne.s32.totalorder %s55, %s71
      %p73 = scmp.eq.s32.totalorder %s26, 0
      %p74 = por %p72, %p73
      %s76 = sadd.s32 %s75, 1
      %p79 = scmp.eq.s32.totalorder %s20, 3
      %p80 = scmp.ne.s32.totalorder %s75, %s77
      %p81 = scmp.eq.s32.totalorder %s20, 0
      %p82 = por %p80, %p81
      %p83 = scmp.ne.s32.totalorder %s75, %s77
      %p84 = scmp.eq.s32.totalorder %s25, 3
      %p85 = por %p83, %p84
      %p86 = scmp.ne.s32.totalorder %s77, %s78
      %p87 = scmp.eq.s32.totalorder %s25, 0
      %p88 = por %p86, %p87
      %p89 = scmp.ne.s32.totalorder %s77, %s78
      %p90 = scmp.eq.s32.totalorder %s26, 3
      %p91 = por %p89, %p90
      %p93 = scmp.ne.s32.totalorder %s78, %s92
      %p94 = scmp.eq.s32.totalorder %s26, 0
      %p95 = por %p93, %p94
      %s97 = sadd.s32 %s96, 1
      %p100 = scmp.eq.s32.totalorder %s20, 3
      %p101 = scmp.ne.s32.totalorder %s96, %s98
      %p102 = scmp.eq.s32.totalorder %s20, 0
      %p103 = por %p101, %p102
      %p104 = scmp.ne.s32.totalorder %s96, %s98
      %p105 = scmp.eq.s32.totalorder %s25, 3
      %p106 = por %p104, %p105
      %p107 = scmp.ne.s32.totalorder %s98, %s99
      %p108 = scmp.eq.s32.totalorder %s25, 0
      %p109 = por %p107, %p108
      %p110 = scmp.ne.s32.totalorder %s98, %s99
      %p111 = scmp.eq.s32.totalorder %s26, 3
      %p112 = por %p110, %p111
      %p114 = scmp.ne.s32.totalorder %s99, %s113
      %p115 = scmp.eq.s32.totalorder %s26, 0
      %p116 = por %p114, %p115
      %s117 = ssub.s32 %s20, %s27
      %p118 = scmp.eq.s32.totalorder %s117, 0
      %s120 = sadd.s32 %s119, 1
      %s121 = scalar_select %p118, %s119, %s120
      %p124 = pneg %p118
      %p125 = scmp.eq.s32.totalorder %s20, 3
      %p126 = por %p124, %p125
      %p127 = scmp.ne.s32.totalorder %s119, %s122
      %p128 = scmp.eq.s32.totalorder %s20, 0
      %p129 = por %p127, %p128
      %p130 = scmp.ne.s32.totalorder %s119, %s122
      %p131 = scmp.eq.s32.totalorder %s25, 3
      %p132 = por %p130, %p131
      %p133 = scmp.ne.s32.totalorder %s122, %s123
      %p134 = scmp.eq.s32.totalorder %s25, 0
      %p135 = por %p133, %p134
      %p136 = scmp.ne.s32.totalorder %s122, %s123
      %p137 = scmp.eq.s32.totalorder %s26, 3
      %p138 = por %p136, %p137
      %p140 = scmp.ne.s32.totalorder %s123, %s139
      %p141 = scmp.eq.s32.totalorder %s26, 0
      %p142 = por %p140, %p141
      %s144 = sadd.s32 %s143, 1
      %p147 = scmp.eq.s32.totalorder %s20, 3
      %p148 = scmp.ne.s32.totalorder %s143, %s145
      %p149 = scmp.eq.s32.totalorder %s20, 0
      %p150 = por %p148, %p149
      %p151 = scmp.ne.s32.totalorder %s143, %s145
      %p152 = scmp.eq.s32.totalorder %s25, 3
      %p153 = por %p151, %p152
      %p154 = scmp.ne.s32.totalorder %s145, %s146
      %p155 = scmp.eq.s32.totalorder %s25, 0
      %p156 = por %p154, %p155
      %p157 = scmp.ne.s32.totalorder %s145, %s146
      %p158 = scmp.eq.s32.totalorder %s26, 3
      %p159 = por %p157, %p158
      %p161 = scmp.ne.s32.totalorder %s146, %s160
      %p162 = scmp.eq.s32.totalorder %s26, 0
      %p163 = por %p161, %p162
      %s165 = sadd.s32 %s164, 1
      %p168 = scmp.eq.s32.totalorder %s20, 3
      %p169 = scmp.ne.s32.totalorder %s164, %s166
      %p170 = scmp.eq.s32.totalorder %s20, 0
      %p171 = por %p169, %p170
      %p172 = scmp.ne.s32.totalorder %s164, %s166
      %p173 = scmp.eq.s32.totalorder %s25, 3
      %p174 = por %p172, %p173
      %p175 = scmp.ne.s32.totalorder %s166, %s167
      %p176 = scmp.eq.s32.totalorder %s25, 0
      %p177 = por %p175, %p176
      %p178 = scmp.ne.s32.totalorder %s166, %s167
      %p179 = scmp.eq.s32.totalorder %s26, 3
      %p180 = por %p178, %p179
      %p182 = scmp.ne.s32.totalorder %s167, %s181
      %p183 = scmp.eq.s32.totalorder %s26, 0
      %p184 = por %p182, %p183
      %p185 = scmp.le.s32.totalorder 1, %s20
      %p186 = scmp.lt.s32.totalorder %s20, 5
      %p187 = pnand %p185, %p186
      %p188 = pneg %p187
      // Predicated region
      $region9: #{tpu_custom_call.1} parent=5 // pred_check
        _
      $region10: #{tpu_custom_call.1} parent=5 // pred_check_branch
        %190 = sbr.rel (%p187) target = $region12
      $region11: #{tpu_custom_call.1} parent=5 // pred_region
        %s191 = ssub.s32 %s20, 1
        // Predicated region
        $region13: #{tpu_custom_call.1} parent=11 // pred_check
          %p192 = pneg %p41
        $region14: #{tpu_custom_call.1} parent=11 // pred_check_branch
          %194 = sbr.rel (%p192) target = $region16
        $region15: #{tpu_custom_call.1} parent=11 // pred_region
          %s196 = ssub.s32 128, 128
          %197 = vsyncadd [#allocation5], %s196
          %s198 = sshll.u32 [#allocation4], 4
          %s199 = int_to_ptr.vmem [resolvable:$true] %s198
          %204 = dma.hbm_to_vmem [thread:$0]  %s0, 128, %s199, [#allocation5], 64, 64, 4
        $region16: #{tpu_custom_call.1} parent=11 // pred_fallthru
          _
        // Predicated region
        $region17: #{tpu_custom_call.1} parent=11 // pred_check
          %p205 = pneg %p88
        $region18: #{tpu_custom_call.1} parent=11 // pred_check_branch
          %207 = sbr.rel (%p205) target = $region20
        $region19: #{tpu_custom_call.1} parent=11 // pred_region
          _
        $region20: #{tpu_custom_call.1} parent=11 // pred_fallthru
          _
        // Predicated region
        $region21: #{tpu_custom_call.1} parent=11 // pred_check
          %p208 = pneg %p109
        $region22: #{tpu_custom_call.1} parent=11 // pred_check_branch
          %210 = sbr.rel (%p208) target = $region24
        $region23: #{tpu_custom_call.1} parent=11 // pred_region
          _
        $region24: #{tpu_custom_call.1} parent=11 // pred_fallthru
          _
      $region12: #{tpu_custom_call.1} parent=5 // pred_fallthru
        _
      %p211 = scmp.lt.s32.totalorder %s20, 4
      // Predicated region
      $region25: #{tpu_custom_call.1} parent=5 // pred_check
        %p212 = pneg %p211
      $region26: #{tpu_custom_call.1} parent=5 // pred_check_branch
        %214 = sbr.rel (%p212) target = $region28
      $region27: #{tpu_custom_call.1} parent=5 // pred_region
        // Predicated region
        $region29: #{tpu_custom_call.1} parent=27 // pred_check
          %p215 = pneg %p61
        $region30: #{tpu_custom_call.1} parent=27 // pred_check_branch
          %217 = sbr.rel (%p215) target = $region32
        $region31: #{tpu_custom_call.1} parent=27 // pred_region
          %s218 = sand.u32 %s51, 1
          %s219 = scalar_lea.sflag [#allocation8], %s218
          %s220 = sand.u32 %s51, 1
          %s221 = smul.addr %s220, 1024
          %s222 = scalar_lea.vmem [#allocation7], %s221
          %s223 = smul.u32 16, %s20
          %s225 = ssub.s32 16384, 16384
          %226 = vsyncadd %s219, %s225
          %s227 = smul.addr %s223, 64
          %s228 = scalar_lea.hbm %s1, %s227
          %s229 = sshll.u32 %s222, 4
          %s230 = int_to_ptr.vmem [resolvable:$true] %s229
          %235 = dma.hbm_to_vmem [thread:$0]  %s228, 16384, %s230, %s219, 4096, 1024, 64
        $region32: #{tpu_custom_call.1} parent=27 // pred_fallthru
          _
      $region28: #{tpu_custom_call.1} parent=5 // pred_fallthru
        _
      %p236 = scmp.le.s32.totalorder 1, %s20
      %p237 = scmp.lt.s32.totalorder %s20, 5
      %p238 = pnand %p236, %p237
      %p239 = pneg %p238
      // Predicated region
      $region33: #{tpu_custom_call.1} parent=5 // pred_check
        _
      $region34: #{tpu_custom_call.1} parent=5 // pred_check_branch
        %241 = sbr.rel (%p238) target = $region36
      $region35: #{tpu_custom_call.1} parent=5 // pred_region
        %s242 = ssub.s32 %s20, 1
        // Predicated region
        $region37: #{tpu_custom_call.1} parent=35 // pred_check
          %p243 = pneg %p41
        $region38: #{tpu_custom_call.1} parent=35 // pred_check_branch
          %245 = sbr.rel (%p243) target = $region40
        $region39: #{tpu_custom_call.1} parent=35 // pred_region
          %246 = dma.done [#allocation5], 128
        $region40: #{tpu_custom_call.1} parent=35 // pred_fallthru
          _
        %s247 = sand.u32 %s54, 1
        %s248 = scalar_lea.sflag [#allocation8], %s247
        %s249 = sand.u32 %s54, 1
        %s250 = smul.addr %s249, 1024
        %s251 = scalar_lea.vmem [#allocation7], %s250
        // Predicated region
        $region41: #{tpu_custom_call.1} parent=35 // pred_check
          %p252 = pneg %p67
        $region42: #{tpu_custom_call.1} parent=35 // pred_check_branch
          %254 = sbr.rel (%p252) target = $region44
        $region43: #{tpu_custom_call.1} parent=35 // pred_region
          %255 = dma.done %s248, 16384
        $region44: #{tpu_custom_call.1} parent=35 // pred_fallthru
          _
        %p256 = pneg %p41
        %p257 = pneg %p38
        %s258 = sand.u32 %s54, 1
        %s259 = scalar_lea.sflag [#allocation8], %s258
        %s260 = sand.u32 %s54, 1
        %s261 = smul.addr %s260, 1024
        %s262 = scalar_lea.vmem [#allocation7], %s261
        %p263 = pneg %p67
        %p264 = pneg %p64
        %p265 = pneg %p88
        %p266 = pneg %p85
        %p267 = pneg %p109
        %p268 = pneg %p106
        %p269 = pneg %p135
        %p270 = pneg %p132
        %s271 = sand.u32 %s122, 1
        %s272 = scalar_lea.sflag [#allocation6], %s271
        %s273 = sand.u32 %s122, 1
        %s274 = smul.addr %s273, 256
        %s275 = scalar_lea.vmem [#allocation9], %s274
        %p276 = pneg %p156
        %p277 = pneg %p153
        %p278 = pneg %p177
        %p279 = pneg %p174
        %s280 = smul.u32 16, %s25
        %s281 = smul.u32 16, %s25
        %p283 = scmp.eq.s32.totalorder %s25, 0
        // Predicated region
        $region45: #{tpu_custom_call.1} parent=35 // pred_check
          %p284 = pneg %p283
        $region46: #{tpu_custom_call.1} parent=35 // pred_check_branch
          %286 = sbr.rel (%p284) target = $region48
        $region47: #{tpu_custom_call.1} parent=35 // pred_region
          %vm287 = vcmask 7168
          %288 = vst.msk [vmem:[#allocation2] sm:$0xff] %vm287, 0.0
          %289 = vst.msk [vmem:[#allocation2 + $0x8] sm:$0xff] %vm287, 0.0
          %290 = vst.msk [vmem:[#allocation3] sm:$0xff] %vm287, 0.0
          %291 = vst.msk [vmem:[#allocation3 + $0x8] sm:$0xff] %vm287, 0.0
        $region48: #{tpu_custom_call.1} parent=35 // pred_fallthru
          _
        %v292 = vld [vmem:[#allocation4] sm:$0xf]
        %v293 = vld [vmem:[#allocation4 + $0x4] sm:$0xf]
        %v294 = vld [vmem:[%s251] sm:$0xff]
        %v295 = vld [vmem:[%s251 + $0x8] sm:$0xff]
        %v296 = vld [vmem:[%s251 + $0x10] sm:$0xff]
        %v297 = vld [vmem:[%s251 + $0x18] sm:$0xff]
        %v298 = vld [vmem:[%s251 + $0x20] sm:$0xff]
        %v299 = vld [vmem:[%s251 + $0x28] sm:$0xff]
        %v300 = vld [vmem:[%s251 + $0x30] sm:$0xff]
        %v301 = vld [vmem:[%s251 + $0x38] sm:$0xff]
        %v302 = vld [vmem:[%s251 + $0x40] sm:$0xff]
        %v303 = vld [vmem:[%s251 + $0x48] sm:$0xff]
        %v304 = vld [vmem:[%s251 + $0x50] sm:$0xff]
        %v305 = vld [vmem:[%s251 + $0x58] sm:$0xff]
        %v306 = vld [vmem:[%s251 + $0x60] sm:$0xff]
        %v307 = vld [vmem:[%s251 + $0x68] sm:$0xff]
        %v308 = vld [vmem:[%s251 + $0x70] sm:$0xff]
        %v309 = vld [vmem:[%s251 + $0x78] sm:$0xff]
        %v310 = vld [vmem:[%s251 + $0x80] sm:$0xff]
        %v311 = vld [vmem:[%s251 + $0x88] sm:$0xff]
        %v312 = vld [vmem:[%s251 + $0x90] sm:$0xff]
        %v313 = vld [vmem:[%s251 + $0x98] sm:$0xff]
        %v314 = vld [vmem:[%s251 + $0xa0] sm:$0xff]
        %v315 = vld [vmem:[%s251 + $0xa8] sm:$0xff]
        %v316 = vld [vmem:[%s251 + $0xb0] sm:$0xff]
        %v317 = vld [vmem:[%s251 + $0xb8] sm:$0xff]
        %v318 = vld [vmem:[%s251 + $0xc0] sm:$0xff]
        %v319 = vld [vmem:[%s251 + $0xc8] sm:$0xff]
        %v320 = vld [vmem:[%s251 + $0xd0] sm:$0xff]
        %v321 = vld [vmem:[%s251 + $0xd8] sm:$0xff]
        %v322 = vld [vmem:[%s251 + $0xe0] sm:$0xff]
        %v323 = vld [vmem:[%s251 + $0xe8] sm:$0xff]
        %v324 = vld [vmem:[%s251 + $0xf0] sm:$0xff]
        %v325 = vld [vmem:[%s251 + $0xf8] sm:$0xff]
        %v326 = vld [vmem:[%s251 + $0x100] sm:$0xff]
        %v327 = vld [vmem:[%s251 + $0x108] sm:$0xff]
        %v328 = vld [vmem:[%s251 + $0x110] sm:$0xff]
        %v329 = vld [vmem:[%s251 + $0x118] sm:$0xff]
        %v330 = vld [vmem:[%s251 + $0x120] sm:$0xff]
        %v331 = vld [vmem:[%s251 + $0x128] sm:$0xff]
        %v332 = vld [vmem:[%s251 + $0x130] sm:$0xff]
        %v333 = vld [vmem:[%s251 + $0x138] sm:$0xff]
        %v334 = vld [vmem:[%s251 + $0x140] sm:$0xff]
        %v335 = vld [vmem:[%s251 + $0x148] sm:$0xff]
        %v336 = vld [vmem:[%s251 + $0x150] sm:$0xff]
        %v337 = vld [vmem:[%s251 + $0x158] sm:$0xff]
        %v338 = vld [vmem:[%s251 + $0x160] sm:$0xff]
        %v339 = vld [vmem:[%s251 + $0x168] sm:$0xff]
        %v340 = vld [vmem:[%s251 + $0x170] sm:$0xff]
        %v341 = vld [vmem:[%s251 + $0x178] sm:$0xff]
        %v342 = vld [vmem:[%s251 + $0x180] sm:$0xff]
        %v343 = vld [vmem:[%s251 + $0x188] sm:$0xff]
        %v344 = vld [vmem:[%s251 + $0x190] sm:$0xff]
        %v345 = vld [vmem:[%s251 + $0x198] sm:$0xff]
        %v346 = vld [vmem:[%s251 + $0x1a0] sm:$0xff]
        %v347 = vld [vmem:[%s251 + $0x1a8] sm:$0xff]
        %v348 = vld [vmem:[%s251 + $0x1b0] sm:$0xff]
        %v349 = vld [vmem:[%s251 + $0x1b8] sm:$0xff]
        %v350 = vld [vmem:[%s251 + $0x1c0] sm:$0xff]
        %v351 = vld [vmem:[%s251 + $0x1c8] sm:$0xff]
        %v352 = vld [vmem:[%s251 + $0x1d0] sm:$0xff]
        %v353 = vld [vmem:[%s251 + $0x1d8] sm:$0xff]
        %v354 = vld [vmem:[%s251 + $0x1e0] sm:$0xff]
        %v355 = vld [vmem:[%s251 + $0x1e8] sm:$0xff]
        %v356 = vld [vmem:[%s251 + $0x1f0] sm:$0xff]
        %v357 = vld [vmem:[%s251 + $0x1f8] sm:$0xff]
        %v358 = vld [vmem:[%s251 + $0x200] sm:$0xff]
        %v359 = vld [vmem:[%s251 + $0x208] sm:$0xff]
        %v360 = vld [vmem:[%s251 + $0x210] sm:$0xff]
        %v361 = vld [vmem:[%s251 + $0x218] sm:$0xff]
        %v362 = vld [vmem:[%s251 + $0x220] sm:$0xff]
        %v363 = vld [vmem:[%s251 + $0x228] sm:$0xff]
        %v364 = vld [vmem:[%s251 + $0x230] sm:$0xff]
        %v365 = vld [vmem:[%s251 + $0x238] sm:$0xff]
        %v366 = vld [vmem:[%s251 + $0x240] sm:$0xff]
        %v367 = vld [vmem:[%s251 + $0x248] sm:$0xff]
        %v368 = vld [vmem:[%s251 + $0x250] sm:$0xff]
        %v369 = vld [vmem:[%s251 + $0x258] sm:$0xff]
        %v370 = vld [vmem:[%s251 + $0x260] sm:$0xff]
        %v371 = vld [vmem:[%s251 + $0x268] sm:$0xff]
        %v372 = vld [vmem:[%s251 + $0x270] sm:$0xff]
        %v373 = vld [vmem:[%s251 + $0x278] sm:$0xff]
        %v374 = vld [vmem:[%s251 + $0x280] sm:$0xff]
        %v375 = vld [vmem:[%s251 + $0x288] sm:$0xff]
        %v376 = vld [vmem:[%s251 + $0x290] sm:$0xff]
        %v377 = vld [vmem:[%s251 + $0x298] sm:$0xff]
        %v378 = vld [vmem:[%s251 + $0x2a0] sm:$0xff]
        %v379 = vld [vmem:[%s251 + $0x2a8] sm:$0xff]
        %v380 = vld [vmem:[%s251 + $0x2b0] sm:$0xff]
        %v381 = vld [vmem:[%s251 + $0x2b8] sm:$0xff]
        %v382 = vld [vmem:[%s251 + $0x2c0] sm:$0xff]
        %v383 = vld [vmem:[%s251 + $0x2c8] sm:$0xff]
        %v384 = vld [vmem:[%s251 + $0x2d0] sm:$0xff]
        %v385 = vld [vmem:[%s251 + $0x2d8] sm:$0xff]
        %v386 = vld [vmem:[%s251 + $0x2e0] sm:$0xff]
        %v387 = vld [vmem:[%s251 + $0x2e8] sm:$0xff]
        %v388 = vld [vmem:[%s251 + $0x2f0] sm:$0xff]
        %v389 = vld [vmem:[%s251 + $0x2f8] sm:$0xff]
        %v390 = vld [vmem:[%s251 + $0x300] sm:$0xff]
        %v391 = vld [vmem:[%s251 + $0x308] sm:$0xff]
        %v392 = vld [vmem:[%s251 + $0x310] sm:$0xff]
        %v393 = vld [vmem:[%s251 + $0x318] sm:$0xff]
        %v394 = vld [vmem:[%s251 + $0x320] sm:$0xff]
        %v395 = vld [vmem:[%s251 + $0x328] sm:$0xff]
        %v396 = vld [vmem:[%s251 + $0x330] sm:$0xff]
        %v397 = vld [vmem:[%s251 + $0x338] sm:$0xff]
        %v398 = vld [vmem:[%s251 + $0x340] sm:$0xff]
        %v399 = vld [vmem:[%s251 + $0x348] sm:$0xff]
        %v400 = vld [vmem:[%s251 + $0x350] sm:$0xff]
        %v401 = vld [vmem:[%s251 + $0x358] sm:$0xff]
        %v402 = vld [vmem:[%s251 + $0x360] sm:$0xff]
        %v403 = vld [vmem:[%s251 + $0x368] sm:$0xff]
        %v404 = vld [vmem:[%s251 + $0x370] sm:$0xff]
        %v405 = vld [vmem:[%s251 + $0x378] sm:$0xff]
        %v406 = vld [vmem:[%s251 + $0x380] sm:$0xff]
        %v407 = vld [vmem:[%s251 + $0x388] sm:$0xff]
        %v408 = vld [vmem:[%s251 + $0x390] sm:$0xff]
        %v409 = vld [vmem:[%s251 + $0x398] sm:$0xff]
        %v410 = vld [vmem:[%s251 + $0x3a0] sm:$0xff]
        %v411 = vld [vmem:[%s251 + $0x3a8] sm:$0xff]
        %v412 = vld [vmem:[%s251 + $0x3b0] sm:$0xff]
        %v413 = vld [vmem:[%s251 + $0x3b8] sm:$0xff]
        %v414 = vld [vmem:[%s251 + $0x3c0] sm:$0xff]
        %v415 = vld [vmem:[%s251 + $0x3c8] sm:$0xff]
        %v416 = vld [vmem:[%s251 + $0x3d0] sm:$0xff]
        %v417 = vld [vmem:[%s251 + $0x3d8] sm:$0xff]
        %v418 = vld [vmem:[%s251 + $0x3e0] sm:$0xff]
        %v419 = vld [vmem:[%s251 + $0x3e8] sm:$0xff]
        %v420 = vld [vmem:[%s251 + $0x3f0] sm:$0xff]
        %v421 = vld [vmem:[%s251 + $0x3f8] sm:$0xff]
        %v424 = vunpack.c.l.b16 %v292
        %v425 = vunpack.c.l.b16 %v293
        %v426 = vpack.c.b16 %v425, %v424
        %v556 = vunpack.c.l.b16 %v294
        %v557 = vunpack.c.h.b16 %v294
        %v558 = vunpack.c.l.b16 %v295
        %v559 = vunpack.c.h.b16 %v295
        %v560 = vunpack.c.l.b16 %v296
        %v561 = vunpack.c.h.b16 %v296
        %v562 = vunpack.c.l.b16 %v297
        %v563 = vunpack.c.h.b16 %v297
        %v564 = vunpack.c.l.b16 %v298
        %v565 = vunpack.c.h.b16 %v298
        %v566 = vunpack.c.l.b16 %v299
        %v567 = vunpack.c.h.b16 %v299
        %v568 = vunpack.c.l.b16 %v300
        %v569 = vunpack.c.h.b16 %v300
        %v570 = vunpack.c.l.b16 %v301
        %v571 = vunpack.c.h.b16 %v301
        %v572 = vunpack.c.l.b16 %v302
        %v573 = vunpack.c.h.b16 %v302
        %v574 = vunpack.c.l.b16 %v303
        %v575 = vunpack.c.h.b16 %v303
        %v576 = vunpack.c.l.b16 %v304
        %v577 = vunpack.c.h.b16 %v304
        %v578 = vunpack.c.l.b16 %v305
        %v579 = vunpack.c.h.b16 %v305
        %v580 = vunpack.c.l.b16 %v306
        %v581 = vunpack.c.h.b16 %v306
        %v582 = vunpack.c.l.b16 %v307
        %v583 = vunpack.c.h.b16 %v307
        %v584 = vunpack.c.l.b16 %v308
        %v585 = vunpack.c.h.b16 %v308
        %v586 = vunpack.c.l.b16 %v309
        %v587 = vunpack.c.h.b16 %v309
        %v588 = vunpack.c.l.b16 %v310
        %v589 = vunpack.c.h.b16 %v310
        %v590 = vunpack.c.l.b16 %v311
        %v591 = vunpack.c.h.b16 %v311
        %v592 = vunpack.c.l.b16 %v312
        %v593 = vunpack.c.h.b16 %v312
        %v594 = vunpack.c.l.b16 %v313
        %v595 = vunpack.c.h.b16 %v313
        %v596 = vunpack.c.l.b16 %v314
        %v597 = vunpack.c.h.b16 %v314
        %v598 = vunpack.c.l.b16 %v315
        %v599 = vunpack.c.h.b16 %v315
        %v600 = vunpack.c.l.b16 %v316
        %v601 = vunpack.c.h.b16 %v316
        %v602 = vunpack.c.l.b16 %v317
        %v603 = vunpack.c.h.b16 %v317
        %v604 = vunpack.c.l.b16 %v318
        %v605 = vunpack.c.h.b16 %v318
        %v606 = vunpack.c.l.b16 %v319
        %v607 = vunpack.c.h.b16 %v319
        %v608 = vunpack.c.l.b16 %v320
        %v609 = vunpack.c.h.b16 %v320
        %v610 = vunpack.c.l.b16 %v321
        %v611 = vunpack.c.h.b16 %v321
        %v612 = vunpack.c.l.b16 %v322
        %v613 = vunpack.c.h.b16 %v322
        %v614 = vunpack.c.l.b16 %v323
        %v615 = vunpack.c.h.b16 %v323
        %v616 = vunpack.c.l.b16 %v324
        %v617 = vunpack.c.h.b16 %v324
        %v618 = vunpack.c.l.b16 %v325
        %v619 = vunpack.c.h.b16 %v325
        %v620 = vunpack.c.l.b16 %v326
        %v621 = vunpack.c.h.b16 %v326
        %v622 = vunpack.c.l.b16 %v327
        %v623 = vunpack.c.h.b16 %v327
        %v624 = vunpack.c.l.b16 %v328
        %v625 = vunpack.c.h.b16 %v328
        %v626 = vunpack.c.l.b16 %v329
        %v627 = vunpack.c.h.b16 %v329
        %v628 = vunpack.c.l.b16 %v330
        %v629 = vunpack.c.h.b16 %v330
        %v630 = vunpack.c.l.b16 %v331
        %v631 = vunpack.c.h.b16 %v331
        %v632 = vunpack.c.l.b16 %v332
        %v633 = vunpack.c.h.b16 %v332
        %v634 = vunpack.c.l.b16 %v333
        %v635 = vunpack.c.h.b16 %v333
        %v636 = vunpack.c.l.b16 %v334
        %v637 = vunpack.c.h.b16 %v334
        %v638 = vunpack.c.l.b16 %v335
        %v639 = vunpack.c.h.b16 %v335
        %v640 = vunpack.c.l.b16 %v336
        %v641 = vunpack.c.h.b16 %v336
        %v642 = vunpack.c.l.b16 %v337
        %v643 = vunpack.c.h.b16 %v337
        %v644 = vunpack.c.l.b16 %v338
        %v645 = vunpack.c.h.b16 %v338
        %v646 = vunpack.c.l.b16 %v339
        %v647 = vunpack.c.h.b16 %v339
        %v648 = vunpack.c.l.b16 %v340
        %v649 = vunpack.c.h.b16 %v340
        %v650 = vunpack.c.l.b16 %v341
        %v651 = vunpack.c.h.b16 %v341
        %v652 = vunpack.c.l.b16 %v342
        %v653 = vunpack.c.h.b16 %v342
        %v654 = vunpack.c.l.b16 %v343
        %v655 = vunpack.c.h.b16 %v343
        %v656 = vunpack.c.l.b16 %v344
        %v657 = vunpack.c.h.b16 %v344
        %v658 = vunpack.c.l.b16 %v345
        %v659 = vunpack.c.h.b16 %v345
        %v660 = vunpack.c.l.b16 %v346
        %v661 = vunpack.c.h.b16 %v346
        %v662 = vunpack.c.l.b16 %v347
        %v663 = vunpack.c.h.b16 %v347
        %v664 = vunpack.c.l.b16 %v348
        %v665 = vunpack.c.h.b16 %v348
        %v666 = vunpack.c.l.b16 %v349
        %v667 = vunpack.c.h.b16 %v349
        %v668 = vunpack.c.l.b16 %v350
        %v669 = vunpack.c.h.b16 %v350
        %v670 = vunpack.c.l.b16 %v351
        %v671 = vunpack.c.h.b16 %v351
        %v672 = vunpack.c.l.b16 %v352
        %v673 = vunpack.c.h.b16 %v352
        %v674 = vunpack.c.l.b16 %v353
        %v675 = vunpack.c.h.b16 %v353
        %v676 = vunpack.c.l.b16 %v354
        %v677 = vunpack.c.h.b16 %v354
        %v678 = vunpack.c.l.b16 %v355
        %v679 = vunpack.c.h.b16 %v355
        %v680 = vunpack.c.l.b16 %v356
        %v681 = vunpack.c.h.b16 %v356
        %v682 = vunpack.c.l.b16 %v357
        %v683 = vunpack.c.h.b16 %v357
        %v684 = vunpack.c.l.b16 %v358
        %v685 = vunpack.c.h.b16 %v358
        %v686 = vunpack.c.l.b16 %v359
        %v687 = vunpack.c.h.b16 %v359
        %v688 = vunpack.c.l.b16 %v360
        %v689 = vunpack.c.h.b16 %v360
        %v690 = vunpack.c.l.b16 %v361
        %v691 = vunpack.c.h.b16 %v361
        %v692 = vunpack.c.l.b16 %v362
        %v693 = vunpack.c.h.b16 %v362
        %v694 = vunpack.c.l.b16 %v363
        %v695 = vunpack.c.h.b16 %v363
        %v696 = vunpack.c.l.b16 %v364
        %v697 = vunpack.c.h.b16 %v364
        %v698 = vunpack.c.l.b16 %v365
        %v699 = vunpack.c.h.b16 %v365
        %v700 = vunpack.c.l.b16 %v366
        %v701 = vunpack.c.h.b16 %v366
        %v702 = vunpack.c.l.b16 %v367
        %v703 = vunpack.c.h.b16 %v367
        %v704 = vunpack.c.l.b16 %v368
        %v705 = vunpack.c.h.b16 %v368
        %v706 = vunpack.c.l.b16 %v369
        %v707 = vunpack.c.h.b16 %v369
        %v708 = vunpack.c.l.b16 %v370
        %v709 = vunpack.c.h.b16 %v370
        %v710 = vunpack.c.l.b16 %v371
        %v711 = vunpack.c.h.b16 %v371
        %v712 = vunpack.c.l.b16 %v372
        %v713 = vunpack.c.h.b16 %v372
        %v714 = vunpack.c.l.b16 %v373
        %v715 = vunpack.c.h.b16 %v373
        %v716 = vunpack.c.l.b16 %v374
        %v717 = vunpack.c.h.b16 %v374
        %v718 = vunpack.c.l.b16 %v375
        %v719 = vunpack.c.h.b16 %v375
        %v720 = vunpack.c.l.b16 %v376
        %v721 = vunpack.c.h.b16 %v376
        %v722 = vunpack.c.l.b16 %v377
        %v723 = vunpack.c.h.b16 %v377
        %v724 = vunpack.c.l.b16 %v378
        %v725 = vunpack.c.h.b16 %v378
        %v726 = vunpack.c.l.b16 %v379
        %v727 = vunpack.c.h.b16 %v379
        %v728 = vunpack.c.l.b16 %v380
        %v729 = vunpack.c.h.b16 %v380
        %v730 = vunpack.c.l.b16 %v381
        %v731 = vunpack.c.h.b16 %v381
        %v732 = vunpack.c.l.b16 %v382
        %v733 = vunpack.c.h.b16 %v382
        %v734 = vunpack.c.l.b16 %v383
        %v735 = vunpack.c.h.b16 %v383
        %v736 = vunpack.c.l.b16 %v384
        %v737 = vunpack.c.h.b16 %v384
        %v738 = vunpack.c.l.b16 %v385
        %v739 = vunpack.c.h.b16 %v385
        %v740 = vunpack.c.l.b16 %v386
        %v741 = vunpack.c.h.b16 %v386
        %v742 = vunpack.c.l.b16 %v387
        %v743 = vunpack.c.h.b16 %v387
        %v744 = vunpack.c.l.b16 %v388
        %v745 = vunpack.c.h.b16 %v388
        %v746 = vunpack.c.l.b16 %v389
        %v747 = vunpack.c.h.b16 %v389
        %v748 = vunpack.c.l.b16 %v390
        %v749 = vunpack.c.h.b16 %v390
        %v750 = vunpack.c.l.b16 %v391
        %v751 = vunpack.c.h.b16 %v391
        %v752 = vunpack.c.l.b16 %v392
        %v753 = vunpack.c.h.b16 %v392
        %v754 = vunpack.c.l.b16 %v393
        %v755 = vunpack.c.h.b16 %v393
        %v756 = vunpack.c.l.b16 %v394
        %v757 = vunpack.c.h.b16 %v394
        %v758 = vunpack.c.l.b16 %v395
        %v759 = vunpack.c.h.b16 %v395
        %v760 = vunpack.c.l.b16 %v396
        %v761 = vunpack.c.h.b16 %v396
        %v762 = vunpack.c.l.b16 %v397
        %v763 = vunpack.c.h.b16 %v397
        %v764 = vunpack.c.l.b16 %v398
        %v765 = vunpack.c.h.b16 %v398
        %v766 = vunpack.c.l.b16 %v399
        %v767 = vunpack.c.h.b16 %v399
        %v768 = vunpack.c.l.b16 %v400
        %v769 = vunpack.c.h.b16 %v400
        %v770 = vunpack.c.l.b16 %v401
        %v771 = vunpack.c.h.b16 %v401
        %v772 = vunpack.c.l.b16 %v402
        %v773 = vunpack.c.h.b16 %v402
        %v774 = vunpack.c.l.b16 %v403
        %v775 = vunpack.c.h.b16 %v403
        %v776 = vunpack.c.l.b16 %v404
        %v777 = vunpack.c.h.b16 %v404
        %v778 = vunpack.c.l.b16 %v405
        %v779 = vunpack.c.h.b16 %v405
        %v780 = vunpack.c.l.b16 %v406
        %v781 = vunpack.c.h.b16 %v406
        %v782 = vunpack.c.l.b16 %v407
        %v783 = vunpack.c.h.b16 %v407
        %v784 = vunpack.c.l.b16 %v408
        %v785 = vunpack.c.h.b16 %v408
        %v786 = vunpack.c.l.b16 %v409
        %v787 = vunpack.c.h.b16 %v409
        %v788 = vunpack.c.l.b16 %v410
        %v789 = vunpack.c.h.b16 %v410
        %v790 = vunpack.c.l.b16 %v411
        %v791 = vunpack.c.h.b16 %v411
        %v792 = vunpack.c.l.b16 %v412
        %v793 = vunpack.c.h.b16 %v412
        %v794 = vunpack.c.l.b16 %v413
        %v795 = vunpack.c.h.b16 %v413
        %v796 = vunpack.c.l.b16 %v414
        %v797 = vunpack.c.h.b16 %v414
        %v798 = vunpack.c.l.b16 %v415
        %v799 = vunpack.c.h.b16 %v415
        %v800 = vunpack.c.l.b16 %v416
        %v801 = vunpack.c.h.b16 %v416
        %v802 = vunpack.c.l.b16 %v417
        %v803 = vunpack.c.h.b16 %v417
        %v804 = vunpack.c.l.b16 %v418
        %v805 = vunpack.c.h.b16 %v418
        %v806 = vunpack.c.l.b16 %v419
        %v807 = vunpack.c.h.b16 %v419
        %v808 = vunpack.c.l.b16 %v420
        %v809 = vunpack.c.h.b16 %v420
        %v810 = vunpack.c.l.b16 %v421
        %v811 = vunpack.c.h.b16 %v421
        %v812 = vpack.c.b16 %v572, %v556
        %v813 = vpack.c.b16 %v573, %v557
        %v814 = vpack.c.b16 %v574, %v558
        %v815 = vpack.c.b16 %v575, %v559
        %v816 = vpack.c.b16 %v576, %v560
        %v817 = vpack.c.b16 %v577, %v561
        %v818 = vpack.c.b16 %v578, %v562
        %v819 = vpack.c.b16 %v579, %v563
        %v820 = vpack.c.b16 %v580, %v564
        %v821 = vpack.c.b16 %v581, %v565
        %v822 = vpack.c.b16 %v582, %v566
        %v823 = vpack.c.b16 %v583, %v567
        %v824 = vpack.c.b16 %v584, %v568
        %v825 = vpack.c.b16 %v585, %v569
        %v826 = vpack.c.b16 %v586, %v570
        %v827 = vpack.c.b16 %v587, %v571
        %v828 = vpack.c.b16 %v604, %v588
        %v829 = vpack.c.b16 %v605, %v589
        %v830 = vpack.c.b16 %v606, %v590
        %v831 = vpack.c.b16 %v607, %v591
        %v832 = vpack.c.b16 %v608, %v592
        %v833 = vpack.c.b16 %v609, %v593
        %v834 = vpack.c.b16 %v610, %v594
        %v835 = vpack.c.b16 %v611, %v595
        %v836 = vpack.c.b16 %v612, %v596
        %v837 = vpack.c.b16 %v613, %v597
        %v838 = vpack.c.b16 %v614, %v598
        %v839 = vpack.c.b16 %v615, %v599
        %v840 = vpack.c.b16 %v616, %v600
        %v841 = vpack.c.b16 %v617, %v601
        %v842 = vpack.c.b16 %v618, %v602
        %v843 = vpack.c.b16 %v619, %v603
        %v844 = vpack.c.b16 %v636, %v620
        %v845 = vpack.c.b16 %v637, %v621
        %v846 = vpack.c.b16 %v638, %v622
        %v847 = vpack.c.b16 %v639, %v623
        %v848 = vpack.c.b16 %v640, %v624
        %v849 = vpack.c.b16 %v641, %v625
        %v850 = vpack.c.b16 %v642, %v626
        %v851 = vpack.c.b16 %v643, %v627
        %v852 = vpack.c.b16 %v644, %v628
        %v853 = vpack.c.b16 %v645, %v629
        %v854 = vpack.c.b16 %v646, %v630
        %v855 = vpack.c.b16 %v647, %v631
        %v856 = vpack.c.b16 %v648, %v632
        %v857 = vpack.c.b16 %v649, %v633
        %v858 = vpack.c.b16 %v650, %v634
        %v859 = vpack.c.b16 %v651, %v635
        %v860 = vpack.c.b16 %v668, %v652
        %v861 = vpack.c.b16 %v669, %v653
        %v862 = vpack.c.b16 %v670, %v654
        %v863 = vpack.c.b16 %v671, %v655
        %v864 = vpack.c.b16 %v672, %v656
        %v865 = vpack.c.b16 %v673, %v657
        %v866 = vpack.c.b16 %v674, %v658
        %v867 = vpack.c.b16 %v675, %v659
        %v868 = vpack.c.b16 %v676, %v660
        %v869 = vpack.c.b16 %v677, %v661
        %v870 = vpack.c.b16 %v678, %v662
        %v871 = vpack.c.b16 %v679, %v663
        %v872 = vpack.c.b16 %v680, %v664
        %v873 = vpack.c.b16 %v681, %v665
        %v874 = vpack.c.b16 %v682, %v666
        %v875 = vpack.c.b16 %v683, %v667
        %v876 = vpack.c.b16 %v700, %v684
        %v877 = vpack.c.b16 %v701, %v685
        %v878 = vpack.c.b16 %v702, %v686
        %v879 = vpack.c.b16 %v703, %v687
        %v880 = vpack.c.b16 %v704, %v688
        %v881 = vpack.c.b16 %v705, %v689
        %v882 = vpack.c.b16 %v706, %v690
        %v883 = vpack.c.b16 %v707, %v691
        %v884 = vpack.c.b16 %v708, %v692
        %v885 = vpack.c.b16 %v709, %v693
        %v886 = vpack.c.b16 %v710, %v694
        %v887 = vpack.c.b16 %v711, %v695
        %v888 = vpack.c.b16 %v712, %v696
        %v889 = vpack.c.b16 %v713, %v697
        %v890 = vpack.c.b16 %v714, %v698
        %v891 = vpack.c.b16 %v715, %v699
        %v892 = vpack.c.b16 %v732, %v716
        %v893 = vpack.c.b16 %v733, %v717
        %v894 = vpack.c.b16 %v734, %v718
        %v895 = vpack.c.b16 %v735, %v719
        %v896 = vpack.c.b16 %v736, %v720
        %v897 = vpack.c.b16 %v737, %v721
        %v898 = vpack.c.b16 %v738, %v722
        %v899 = vpack.c.b16 %v739, %v723
        %v900 = vpack.c.b16 %v740, %v724
        %v901 = vpack.c.b16 %v741, %v725
        %v902 = vpack.c.b16 %v742, %v726
        %v903 = vpack.c.b16 %v743, %v727
        %v904 = vpack.c.b16 %v744, %v728
        %v905 = vpack.c.b16 %v745, %v729
        %v906 = vpack.c.b16 %v746, %v730
        %v907 = vpack.c.b16 %v747, %v731
        %v908 = vpack.c.b16 %v764, %v748
        %v909 = vpack.c.b16 %v765, %v749
        %v910 = vpack.c.b16 %v766, %v750
        %v911 = vpack.c.b16 %v767, %v751
        %v912 = vpack.c.b16 %v768, %v752
        %v913 = vpack.c.b16 %v769, %v753
        %v914 = vpack.c.b16 %v770, %v754
        %v915 = vpack.c.b16 %v771, %v755
        %v916 = vpack.c.b16 %v772, %v756
        %v917 = vpack.c.b16 %v773, %v757
        %v918 = vpack.c.b16 %v774, %v758
        %v919 = vpack.c.b16 %v775, %v759
        %v920 = vpack.c.b16 %v776, %v760
        %v921 = vpack.c.b16 %v777, %v761
        %v922 = vpack.c.b16 %v778, %v762
        %v923 = vpack.c.b16 %v779, %v763
        %v924 = vpack.c.b16 %v796, %v780
        %v925 = vpack.c.b16 %v797, %v781
        %v926 = vpack.c.b16 %v798, %v782
        %v927 = vpack.c.b16 %v799, %v783
        %v928 = vpack.c.b16 %v800, %v784
        %v929 = vpack.c.b16 %v801, %v785
        %v930 = vpack.c.b16 %v802, %v786
        %v931 = vpack.c.b16 %v803, %v787
        %v932 = vpack.c.b16 %v804, %v788
        %v933 = vpack.c.b16 %v805, %v789
        %v934 = vpack.c.b16 %v806, %v790
        %v935 = vpack.c.b16 %v807, %v791
        %v936 = vpack.c.b16 %v808, %v792
        %v937 = vpack.c.b16 %v809, %v793
        %v938 = vpack.c.b16 %v810, %v794
        %v939 = vpack.c.b16 %v811, %v795
        %1068 = vmatprep.subr.bf16.mxu0 %v813
        %1069 = vmatpush1.bf16.msra.mxu0 %v812
        %1070 = vmatprep.subr.bf16.mxu0 %v829
        %1071 = vmatpush1.bf16.msra.mxu0 %v828
        %1072 = vmatprep.subr.bf16.mxu0 %v845
        %1073 = vmatpush1.bf16.msra.mxu0 %v844
        %1074 = vmatprep.subr.bf16.mxu0 %v861
        %1075 = vmatpush1.bf16.msra.mxu0 %v860
        %1076 = vmatprep.subr.bf16.mxu0 %v877
        %1077 = vmatpush1.bf16.msra.mxu0 %v876
        %1078 = vmatprep.subr.bf16.mxu0 %v893
        %1079 = vmatpush1.bf16.msra.mxu0 %v892
        %1080 = vmatprep.subr.bf16.mxu0 %v909
        %1081 = vmatpush1.bf16.msra.mxu0 %v908
        %1082 = vmatprep.subr.bf16.mxu0 %v925
        %1083 = vmatpush1.bf16.msra.mxu0 %v924
        %1084 = vmatprep.subr.bf16.mxu0 0
        %1085 = vmatpush1.bf16.msra.mxu0 0
        %1086 = vmatprep.subr.bf16.mxu0 0
        %1087 = vmatpush1.bf16.msra.mxu0 0
        %1088 = vmatprep.subr.bf16.mxu0 0
        %1089 = vmatpush1.bf16.msra.mxu0 0
        %1090 = vmatprep.subr.bf16.mxu0 0
        %1091 = vmatpush1.bf16.msra.mxu0 0
        %1092 = vmatprep.subr.bf16.mxu0 0
        %1093 = vmatpush1.bf16.msra.mxu0 0
        %1094 = vmatprep.subr.bf16.mxu0 0
        %1095 = vmatpush1.bf16.msra.mxu0 0
        %1096 = vmatprep.subr.bf16.mxu0 0
        %1097 = vmatpush1.bf16.msra.mxu0 0
        %1098 = vmatprep.subr.bf16.mxu0 0
        %1099 = vmatpush1.bf16.msra.mxu0 0
        %1100 = vmatprep.mubr.bf16.mxu0 0
        %1101 = vmatmul.mubr.bf16.gmra.mrb[0].mxu0 %v426
        %v1102 = vpop.f32.mrb[0].mxu0
        %v1103 = vadd.f32 0.0, %v1102
        %v1104 = vpop.f32.mrb[0].mxu0
        %v1105 = vadd.f32 0.0, %v1104
        %v1106 = vpop.f32.mrb[0].mxu0
        %v1107 = vadd.f32 0.0, %v1106
        %v1108 = vpop.f32.mrb[0].mxu0
        %v1109 = vadd.f32 0.0, %v1108
        %1110 = vdwg.mxu0
        %1111 = vmatprep.subr.bf16.mxu0 %v815
        %1112 = vmatpush1.bf16.msra.mxu0 %v814
        %1113 = vmatprep.subr.bf16.mxu0 %v831
        %1114 = vmatpush1.bf16.msra.mxu0 %v830
        %1115 = vmatprep.subr.bf16.mxu0 %v847
        %1116 = vmatpush1.bf16.msra.mxu0 %v846
        %1117 = vmatprep.subr.bf16.mxu0 %v863
        %1118 = vmatpush1.bf16.msra.mxu0 %v862
        %1119 = vmatprep.subr.bf16.mxu0 %v879
        %1120 = vmatpush1.bf16.msra.mxu0 %v878
        %1121 = vmatprep.subr.bf16.mxu0 %v895
        %1122 = vmatpush1.bf16.msra.mxu0 %v894
        %1123 = vmatprep.subr.bf16.mxu0 %v911
        %1124 = vmatpush1.bf16.msra.mxu0 %v910
        %1125 = vmatprep.subr.bf16.mxu0 %v927
        %1126 = vmatpush1.bf16.msra.mxu0 %v926
        %1127 = vmatprep.subr.bf16.mxu0 0
        %1128 = vmatpush1.bf16.msra.mxu0 0
        %1129 = vmatprep.subr.bf16.mxu0 0
        %1130 = vmatpush1.bf16.msra.mxu0 0
        %1131 = vmatprep.subr.bf16.mxu0 0
        %1132 = vmatpush1.bf16.msra.mxu0 0
        %1133 = vmatprep.subr.bf16.mxu0 0
        %1134 = vmatpush1.bf16.msra.mxu0 0
        %1135 = vmatprep.subr.bf16.mxu0 0
        %1136 = vmatpush1.bf16.msra.mxu0 0
        %1137 = vmatprep.subr.bf16.mxu0 0
        %1138 = vmatpush1.bf16.msra.mxu0 0
        %1139 = vmatprep.subr.bf16.mxu0 0
        %1140 = vmatpush1.bf16.msra.mxu0 0
        %1141 = vmatprep.subr.bf16.mxu0 0
        %1142 = vmatpush1.bf16.msra.mxu0 0
        %1143 = vmatprep.mubr.bf16.mxu0 0
        %1144 = vmatmul.mubr.bf16.gmra.mrb[0].mxu0 %v426
        %v1145 = vpop.f32.mrb[0].mxu0
        %v1146 = vadd.f32 0.0, %v1145
        %v1147 = vpop.f32.mrb[0].mxu0
        %v1148 = vadd.f32 0.0, %v1147
        %v1149 = vpop.f32.mrb[0].mxu0
        %v1150 = vadd.f32 0.0, %v1149
        %v1151 = vpop.f32.mrb[0].mxu0
        %v1152 = vadd.f32 0.0, %v1151
        %1153 = vdwg.mxu0
        %1154 = vmatprep.subr.bf16.mxu0 %v817
        %1155 = vmatpush1.bf16.msra.mxu0 %v816
        %1156 = vmatprep.subr.bf16.mxu0 %v833
        %1157 = vmatpush1.bf16.msra.mxu0 %v832
        %1158 = vmatprep.subr.bf16.mxu0 %v849
        %1159 = vmatpush1.bf16.msra.mxu0 %v848
        %1160 = vmatprep.subr.bf16.mxu0 %v865
        %1161 = vmatpush1.bf16.msra.mxu0 %v864
        %1162 = vmatprep.subr.bf16.mxu0 %v881
        %1163 = vmatpush1.bf16.msra.mxu0 %v880
        %1164 = vmatprep.subr.bf16.mxu0 %v897
        %1165 = vmatpush1.bf16.msra.mxu0 %v896
        %1166 = vmatprep.subr.bf16.mxu0 %v913
        %1167 = vmatpush1.bf16.msra.mxu0 %v912
        %1168 = vmatprep.subr.bf16.mxu0 %v929
        %1169 = vmatpush1.bf16.msra.mxu0 %v928
        %1170 = vmatprep.subr.bf16.mxu0 0
        %1171 = vmatpush1.bf16.msra.mxu0 0
        %1172 = vmatprep.subr.bf16.mxu0 0
        %1173 = vmatpush1.bf16.msra.mxu0 0
        %1174 = vmatprep.subr.bf16.mxu0 0
        %1175 = vmatpush1.bf16.msra.mxu0 0
        %1176 = vmatprep.subr.bf16.mxu0 0
        %1177 = vmatpush1.bf16.msra.mxu0 0
        %1178 = vmatprep.subr.bf16.mxu0 0
        %1179 = vmatpush1.bf16.msra.mxu0 0
        %1180 = vmatprep.subr.bf16.mxu0 0
        %1181 = vmatpush1.bf16.msra.mxu0 0
        %1182 = vmatprep.subr.bf16.mxu0 0
        %1183 = vmatpush1.bf16.msra.mxu0 0
        %1184 = vmatprep.subr.bf16.mxu0 0
        %1185 = vmatpush1.bf16.msra.mxu0 0
        %1186 = vmatprep.mubr.bf16.mxu0 0
        %1187 = vmatmul.mubr.bf16.gmra.mrb[0].mxu0 %v426
        %v1188 = vpop.f32.mrb[0].mxu0
        %v1189 = vadd.f32 0.0, %v1188
        %v1190 = vpop.f32.mrb[0].mxu0
        %v1191 = vadd.f32 0.0, %v1190
        %v1192 = vpop.f32.mrb[0].mxu0
        %v1193 = vadd.f32 0.0, %v1192
        %v1194 = vpop.f32.mrb[0].mxu0
        %v1195 = vadd.f32 0.0, %v1194
        %1196 = vdwg.mxu0
        %1197 = vmatprep.subr.bf16.mxu0 %v819
        %1198 = vmatpush1.bf16.msra.mxu0 %v818
        %1199 = vmatprep.subr.bf16.mxu0 %v835
        %1200 = vmatpush1.bf16.msra.mxu0 %v834
        %1201 = vmatprep.subr.bf16.mxu0 %v851
        %1202 = vmatpush1.bf16.msra.mxu0 %v850
        %1203 = vmatprep.subr.bf16.mxu0 %v867
        %1204 = vmatpush1.bf16.msra.mxu0 %v866
        %1205 = vmatprep.subr.bf16.mxu0 %v883
        %1206 = vmatpush1.bf16.msra.mxu0 %v882
        %1207 = vmatprep.subr.bf16.mxu0 %v899
        %1208 = vmatpush1.bf16.msra.mxu0 %v898
        %1209 = vmatprep.subr.bf16.mxu0 %v915
        %1210 = vmatpush1.bf16.msra.mxu0 %v914
        %1211 = vmatprep.subr.bf16.mxu0 %v931
        %1212 = vmatpush1.bf16.msra.mxu0 %v930
        %1213 = vmatprep.subr.bf16.mxu0 0
        %1214 = vmatpush1.bf16.msra.mxu0 0
        %1215 = vmatprep.subr.bf16.mxu0 0
        %1216 = vmatpush1.bf16.msra.mxu0 0
        %1217 = vmatprep.subr.bf16.mxu0 0
        %1218 = vmatpush1.bf16.msra.mxu0 0
        %1219 = vmatprep.subr.bf16.mxu0 0
        %1220 = vmatpush1.bf16.msra.mxu0 0
        %1221 = vmatprep.subr.bf16.mxu0 0
        %1222 = vmatpush1.bf16.msra.mxu0 0
        %1223 = vmatprep.subr.bf16.mxu0 0
        %1224 = vmatpush1.bf16.msra.mxu0 0
        %1225 = vmatprep.subr.bf16.mxu0 0
        %1226 = vmatpush1.bf16.msra.mxu0 0
        %1227 = vmatprep.subr.bf16.mxu0 0
        %1228 = vmatpush1.bf16.msra.mxu0 0
        %1229 = vmatprep.mubr.bf16.mxu0 0
        %1230 = vmatmul.mubr.bf16.gmra.mrb[0].mxu0 %v426
        %v1231 = vpop.f32.mrb[0].mxu0
        %v1232 = vadd.f32 0.0, %v1231
        %v1233 = vpop.f32.mrb[0].mxu0
        %v1234 = vadd.f32 0.0, %v1233
        %v1235 = vpop.f32.mrb[0].mxu0
        %v1236 = vadd.f32 0.0, %v1235
        %v1237 = vpop.f32.mrb[0].mxu0
        %v1238 = vadd.f32 0.0, %v1237
        %1239 = vdwg.mxu0
        %1240 = vmatprep.subr.bf16.mxu0 %v821
        %1241 = vmatpush1.bf16.msra.mxu0 %v820
        %1242 = vmatprep.subr.bf16.mxu0 %v837
        %1243 = vmatpush1.bf16.msra.mxu0 %v836
        %1244 = vmatprep.subr.bf16.mxu0 %v853
        %1245 = vmatpush1.bf16.msra.mxu0 %v852
        %1246 = vmatprep.subr.bf16.mxu0 %v869
        %1247 = vmatpush1.bf16.msra.mxu0 %v868
        %1248 = vmatprep.subr.bf16.mxu0 %v885
        %1249 = vmatpush1.bf16.msra.mxu0 %v884
        %1250 = vmatprep.subr.bf16.mxu0 %v901
        %1251 = vmatpush1.bf16.msra.mxu0 %v900
        %1252 = vmatprep.subr.bf16.mxu0 %v917
        %1253 = vmatpush1.bf16.msra.mxu0 %v916
        %1254 = vmatprep.subr.bf16.mxu0 %v933
        %1255 = vmatpush1.bf16.msra.mxu0 %v932
        %1256 = vmatprep.subr.bf16.mxu0 0
        %1257 = vmatpush1.bf16.msra.mxu0 0
        %1258 = vmatprep.subr.bf16.mxu0 0
        %1259 = vmatpush1.bf16.msra.mxu0 0
        %1260 = vmatprep.subr.bf16.mxu0 0
        %1261 = vmatpush1.bf16.msra.mxu0 0
        %1262 = vmatprep.subr.bf16.mxu0 0
        %1263 = vmatpush1.bf16.msra.mxu0 0
        %1264 = vmatprep.subr.bf16.mxu0 0
        %1265 = vmatpush1.bf16.msra.mxu0 0
        %1266 = vmatprep.subr.bf16.mxu0 0
        %1267 = vmatpush1.bf16.msra.mxu0 0
        %1268 = vmatprep.subr.bf16.mxu0 0
        %1269 = vmatpush1.bf16.msra.mxu0 0
        %1270 = vmatprep.subr.bf16.mxu0 0
        %1271 = vmatpush1.bf16.msra.mxu0 0
        %1272 = vmatprep.mubr.bf16.mxu0 0
        %1273 = vmatmul.mubr.bf16.gmra.mrb[0].mxu0 %v426
        %v1274 = vpop.f32.mrb[0].mxu0
        %v1275 = vadd.f32 0.0, %v1274
        %v1276 = vpop.f32.mrb[0].mxu0
        %v1277 = vadd.f32 0.0, %v1276
        %v1278 = vpop.f32.mrb[0].mxu0
        %v1279 = vadd.f32 0.0, %v1278
        %v1280 = vpop.f32.mrb[0].mxu0
        %v1281 = vadd.f32 0.0, %v1280
        %1282 = vdwg.mxu0
        %1283 = vmatprep.subr.bf16.mxu0 %v823
        %1284 = vmatpush1.bf16.msra.mxu0 %v822
        %1285 = vmatprep.subr.bf16.mxu0 %v839
        %1286 = vmatpush1.bf16.msra.mxu0 %v838
        %1287 = vmatprep.subr.bf16.mxu0 %v855
        %1288 = vmatpush1.bf16.msra.mxu0 %v854
        %1289 = vmatprep.subr.bf16.mxu0 %v871
        %1290 = vmatpush1.bf16.msra.mxu0 %v870
        %1291 = vmatprep.subr.bf16.mxu0 %v887
        %1292 = vmatpush1.bf16.msra.mxu0 %v886
        %1293 = vmatprep.subr.bf16.mxu0 %v903
        %1294 = vmatpush1.bf16.msra.mxu0 %v902
        %1295 = vmatprep.subr.bf16.mxu0 %v919
        %1296 = vmatpush1.bf16.msra.mxu0 %v918
        %1297 = vmatprep.subr.bf16.mxu0 %v935
        %1298 = vmatpush1.bf16.msra.mxu0 %v934
        %1299 = vmatprep.subr.bf16.mxu0 0
        %1300 = vmatpush1.bf16.msra.mxu0 0
        %1301 = vmatprep.subr.bf16.mxu0 0
        %1302 = vmatpush1.bf16.msra.mxu0 0
        %1303 = vmatprep.subr.bf16.mxu0 0
        %1304 = vmatpush1.bf16.msra.mxu0 0
        %1305 = vmatprep.subr.bf16.mxu0 0
        %1306 = vmatpush1.bf16.msra.mxu0 0
        %1307 = vmatprep.subr.bf16.mxu0 0
        %1308 = vmatpush1.bf16.msra.mxu0 0
        %1309 = vmatprep.subr.bf16.mxu0 0
        %1310 = vmatpush1.bf16.msra.mxu0 0
        %1311 = vmatprep.subr.bf16.mxu0 0
        %1312 = vmatpush1.bf16.msra.mxu0 0
        %1313 = vmatprep.subr.bf16.mxu0 0
        %1314 = vmatpush1.bf16.msra.mxu0 0
        %1315 = vmatprep.mubr.bf16.mxu0 0
        %1316 = vmatmul.mubr.bf16.gmra.mrb[0].mxu0 %v426
        %v1317 = vpop.f32.mrb[0].mxu0
        %v1318 = vadd.f32 0.0, %v1317
        %v1319 = vpop.f32.mrb[0].mxu0
        %v1320 = vadd.f32 0.0, %v1319
        %v1321 = vpop.f32.mrb[0].mxu0
        %v1322 = vadd.f32 0.0, %v1321
        %v1323 = vpop.f32.mrb[0].mxu0
        %v1324 = vadd.f32 0.0, %v1323
        %1325 = vdwg.mxu0
        %1326 = vmatprep.subr.bf16.mxu0 %v825
        %1327 = vmatpush1.bf16.msra.mxu0 %v824
        %1328 = vmatprep.subr.bf16.mxu0 %v841
        %1329 = vmatpush1.bf16.msra.mxu0 %v840
        %1330 = vmatprep.subr.bf16.mxu0 %v857
        %1331 = vmatpush1.bf16.msra.mxu0 %v856
        %1332 = vmatprep.subr.bf16.mxu0 %v873
        %1333 = vmatpush1.bf16.msra.mxu0 %v872
        %1334 = vmatprep.subr.bf16.mxu0 %v889
        %1335 = vmatpush1.bf16.msra.mxu0 %v888
        %1336 = vmatprep.subr.bf16.mxu0 %v905
        %1337 = vmatpush1.bf16.msra.mxu0 %v904
        %1338 = vmatprep.subr.bf16.mxu0 %v921
        %1339 = vmatpush1.bf16.msra.mxu0 %v920
        %1340 = vmatprep.subr.bf16.mxu0 %v937
        %1341 = vmatpush1.bf16.msra.mxu0 %v936
        %1342 = vmatprep.subr.bf16.mxu0 0
        %1343 = vmatpush1.bf16.msra.mxu0 0
        %1344 = vmatprep.subr.bf16.mxu0 0
        %1345 = vmatpush1.bf16.msra.mxu0 0
        %1346 = vmatprep.subr.bf16.mxu0 0
        %1347 = vmatpush1.bf16.msra.mxu0 0
        %1348 = vmatprep.subr.bf16.mxu0 0
        %1349 = vmatpush1.bf16.msra.mxu0 0
        %1350 = vmatprep.subr.bf16.mxu0 0
        %1351 = vmatpush1.bf16.msra.mxu0 0
        %1352 = vmatprep.subr.bf16.mxu0 0
        %1353 = vmatpush1.bf16.msra.mxu0 0
        %1354 = vmatprep.subr.bf16.mxu0 0
        %1355 = vmatpush1.bf16.msra.mxu0 0
        %1356 = vmatprep.subr.bf16.mxu0 0
        %1357 = vmatpush1.bf16.msra.mxu0 0
        %1358 = vmatprep.mubr.bf16.mxu0 0
        %1359 = vmatmul.mubr.bf16.gmra.mrb[0].mxu0 %v426
        %v1360 = vpop.f32.mrb[0].mxu0
        %v1361 = vadd.f32 0.0, %v1360
        %v1362 = vpop.f32.mrb[0].mxu0
        %v1363 = vadd.f32 0.0, %v1362
        %v1364 = vpop.f32.mrb[0].mxu0
        %v1365 = vadd.f32 0.0, %v1364
        %v1366 = vpop.f32.mrb[0].mxu0
        %v1367 = vadd.f32 0.0, %v1366
        %1368 = vdwg.mxu0
        %1369 = vmatprep.subr.bf16.mxu0 %v827
        %1370 = vmatpush1.bf16.msra.mxu0 %v826
        %1371 = vmatprep.subr.bf16.mxu0 %v843
        %1372 = vmatpush1.bf16.msra.mxu0 %v842
        %1373 = vmatprep.subr.bf16.mxu0 %v859
        %1374 = vmatpush1.bf16.msra.mxu0 %v858
        %1375 = vmatprep.subr.bf16.mxu0 %v875
        %1376 = vmatpush1.bf16.msra.mxu0 %v874
        %1377 = vmatprep.subr.bf16.mxu0 %v891
        %1378 = vmatpush1.bf16.msra.mxu0 %v890
        %1379 = vmatprep.subr.bf16.mxu0 %v907
        %1380 = vmatpush1.bf16.msra.mxu0 %v906
        %1381 = vmatprep.subr.bf16.mxu0 %v923
        %1382 = vmatpush1.bf16.msra.mxu0 %v922
        %1383 = vmatprep.subr.bf16.mxu0 %v939
        %1384 = vmatpush1.bf16.msra.mxu0 %v938
        %1385 = vmatprep.subr.bf16.mxu0 0
        %1386 = vmatpush1.bf16.msra.mxu0 0
        %1387 = vmatprep.subr.bf16.mxu0 0
        %1388 = vmatpush1.bf16.msra.mxu0 0
        %1389 = vmatprep.subr.bf16.mxu0 0
        %1390 = vmatpush1.bf16.msra.mxu0 0
        %1391 = vmatprep.subr.bf16.mxu0 0
        %1392 = vmatpush1.bf16.msra.mxu0 0
        %1393 = vmatprep.subr.bf16.mxu0 0
        %1394 = vmatpush1.bf16.msra.mxu0 0
        %1395 = vmatprep.subr.bf16.mxu0 0
        %1396 = vmatpush1.bf16.msra.mxu0 0
        %1397 = vmatprep.subr.bf16.mxu0 0
        %1398 = vmatpush1.bf16.msra.mxu0 0
        %1399 = vmatprep.subr.bf16.mxu0 0
        %1400 = vmatpush1.bf16.msra.mxu0 0
        %1401 = vmatprep.mubr.bf16.mxu0 0
        %1402 = vmatmul.mubr.bf16.gmra.mrb[0].mxu0 %v426
        %v1403 = vpop.f32.mrb[0].mxu0
        %v1404 = vadd.f32 0.0, %v1403
        %v1405 = vpop.f32.mrb[0].mxu0
        %v1406 = vadd.f32 0.0, %v1405
        %v1407 = vpop.f32.mrb[0].mxu0
        %v1408 = vadd.f32 0.0, %v1407
        %v1409 = vpop.f32.mrb[0].mxu0
        %v1410 = vadd.f32 0.0, %v1409
        %1411 = vdwg.mxu0
        %1412 = vst [vmem:[%s275] sm:$0xff] %v1103
        %1413 = vst [vmem:[%s275 + $0x8] sm:$0xff] %v1105
        %1414 = vst [vmem:[%s275 + $0x10] sm:$0xff] %v1146
        %1415 = vst [vmem:[%s275 + $0x18] sm:$0xff] %v1148
        %1416 = vst [vmem:[%s275 + $0x20] sm:$0xff] %v1189
        %1417 = vst [vmem:[%s275 + $0x28] sm:$0xff] %v1191
        %1418 = vst [vmem:[%s275 + $0x30] sm:$0xff] %v1232
        %1419 = vst [vmem:[%s275 + $0x38] sm:$0xff] %v1234
        %1420 = vst [vmem:[%s275 + $0x40] sm:$0xff] %v1275
        %1421 = vst [vmem:[%s275 + $0x48] sm:$0xff] %v1277
        %1422 = vst [vmem:[%s275 + $0x50] sm:$0xff] %v1318
        %1423 = vst [vmem:[%s275 + $0x58] sm:$0xff] %v1320
        %1424 = vst [vmem:[%s275 + $0x60] sm:$0xff] %v1361
        %1425 = vst [vmem:[%s275 + $0x68] sm:$0xff] %v1363
        %1426 = vst [vmem:[%s275 + $0x70] sm:$0xff] %v1404
        %1427 = vst [vmem:[%s275 + $0x78] sm:$0xff] %v1406
        %1428 = vst [vmem:[%s275 + $0x80] sm:$0xff] %v1107
        %1429 = vst [vmem:[%s275 + $0x88] sm:$0xff] %v1109
        %1430 = vst [vmem:[%s275 + $0x90] sm:$0xff] %v1150
        %1431 = vst [vmem:[%s275 + $0x98] sm:$0xff] %v1152
        %1432 = vst [vmem:[%s275 + $0xa0] sm:$0xff] %v1193
        %1433 = vst [vmem:[%s275 + $0xa8] sm:$0xff] %v1195
        %1434 = vst [vmem:[%s275 + $0xb0] sm:$0xff] %v1236
        %1435 = vst [vmem:[%s275 + $0xb8] sm:$0xff] %v1238
        %1436 = vst [vmem:[%s275 + $0xc0] sm:$0xff] %v1279
        %1437 = vst [vmem:[%s275 + $0xc8] sm:$0xff] %v1281
        %1438 = vst [vmem:[%s275 + $0xd0] sm:$0xff] %v1322
        %1439 = vst [vmem:[%s275 + $0xd8] sm:$0xff] %v1324
        %1440 = vst [vmem:[%s275 + $0xe0] sm:$0xff] %v1365
        %1441 = vst [vmem:[%s275 + $0xe8] sm:$0xff] %v1367
        %1442 = vst [vmem:[%s275 + $0xf0] sm:$0xff] %v1408
        %1443 = vst [vmem:[%s275 + $0xf8] sm:$0xff] %v1410
        %v1444 = vld [vmem:[#allocation2] sm:$0xff]
        %v1445 = vld [vmem:[#allocation2 + $0x8] sm:$0xff]
        %v1446 = vadd.f32 %v1103, %v1105
        %v1447 = vadd.f32 %v1446, %v1146
        %v1448 = vadd.f32 %v1447, %v1148
        %v1449 = vadd.f32 %v1448, %v1189
        %v1450 = vadd.f32 %v1449, %v1191
        %v1451 = vadd.f32 %v1450, %v1232
        %v1452 = vadd.f32 %v1451, %v1234
        %v1453 = vadd.f32 %v1452, %v1275
        %v1454 = vadd.f32 %v1453, %v1277
        %v1455 = vadd.f32 %v1454, %v1318
        %v1456 = vadd.f32 %v1455, %v1320
        %v1457 = vadd.f32 %v1456, %v1361
        %v1458 = vadd.f32 %v1457, %v1363
        %v1459 = vadd.f32 %v1458, %v1404
        %v1460 = vadd.f32 %v1459, %v1406
        %1461 = vadd.xlane.f32.xlu0 %v1460
        %v1462 = vpop.xlane.xlu0 %1461
        %v1463 = vadd.f32 %v1107, %v1109
        %v1464 = vadd.f32 %v1463, %v1150
        %v1465 = vadd.f32 %v1464, %v1152
        %v1466 = vadd.f32 %v1465, %v1193
        %v1467 = vadd.f32 %v1466, %v1195
        %v1468 = vadd.f32 %v1467, %v1236
        %v1469 = vadd.f32 %v1468, %v1238
        %v1470 = vadd.f32 %v1469, %v1279
        %v1471 = vadd.f32 %v1470, %v1281
        %v1472 = vadd.f32 %v1471, %v1322
        %v1473 = vadd.f32 %v1472, %v1324
        %v1474 = vadd.f32 %v1473, %v1365
        %v1475 = vadd.f32 %v1474, %v1367
        %v1476 = vadd.f32 %v1475, %v1408
        %v1477 = vadd.f32 %v1476, %v1410
        %1478 = vadd.xlane.f32.xlu0 %v1477
        %v1479 = vpop.xlane.xlu0 %1478
        %v1480 = vadd.f32 %v1444, %v1462
        %v1481 = vadd.f32 %v1445, %v1479
        %vm1482 = vcmask 7168
        %1483 = vst.msk [vmem:[#allocation2] sm:$0xff] %vm1482, %v1480
        %1484 = vst.msk [vmem:[#allocation2 + $0x8] sm:$0xff] %vm1482, %v1481
        %v1485 = vld [vmem:[#allocation3] sm:$0xff]
        %v1486 = vld [vmem:[#allocation3 + $0x8] sm:$0xff]
        %v1487 = vmul.f32 %v1103, %v1103
        %v1488 = vmul.f32 %v1105, %v1105
        %v1489 = vmul.f32 %v1146, %v1146
        %v1490 = vmul.f32 %v1148, %v1148
        %v1491 = vmul.f32 %v1189, %v1189
        %v1492 = vmul.f32 %v1191, %v1191
        %v1493 = vmul.f32 %v1232, %v1232
        %v1494 = vmul.f32 %v1234, %v1234
        %v1495 = vmul.f32 %v1275, %v1275
        %v1496 = vmul.f32 %v1277, %v1277
        %v1497 = vmul.f32 %v1318, %v1318
        %v1498 = vmul.f32 %v1320, %v1320
        %v1499 = vmul.f32 %v1361, %v1361
        %v1500 = vmul.f32 %v1363, %v1363
        %v1501 = vmul.f32 %v1404, %v1404
        %v1502 = vmul.f32 %v1406, %v1406
        %v1503 = vmul.f32 %v1107, %v1107
        %v1504 = vmul.f32 %v1109, %v1109
        %v1505 = vmul.f32 %v1150, %v1150
        %v1506 = vmul.f32 %v1152, %v1152
        %v1507 = vmul.f32 %v1193, %v1193
        %v1508 = vmul.f32 %v1195, %v1195
        %v1509 = vmul.f32 %v1236, %v1236
        %v1510 = vmul.f32 %v1238, %v1238
        %v1511 = vmul.f32 %v1279, %v1279
        %v1512 = vmul.f32 %v1281, %v1281
        %v1513 = vmul.f32 %v1322, %v1322
        %v1514 = vmul.f32 %v1324, %v1324
        %v1515 = vmul.f32 %v1365, %v1365
        %v1516 = vmul.f32 %v1367, %v1367
        %v1517 = vmul.f32 %v1408, %v1408
        %v1518 = vmul.f32 %v1410, %v1410
        %v1519 = vadd.f32 %v1487, %v1488
        %v1520 = vadd.f32 %v1519, %v1489
        %v1521 = vadd.f32 %v1520, %v1490
        %v1522 = vadd.f32 %v1521, %v1491
        %v1523 = vadd.f32 %v1522, %v1492
        %v1524 = vadd.f32 %v1523, %v1493
        %v1525 = vadd.f32 %v1524, %v1494
        %v1526 = vadd.f32 %v1525, %v1495
        %v1527 = vadd.f32 %v1526, %v1496
        %v1528 = vadd.f32 %v1527, %v1497
        %v1529 = vadd.f32 %v1528, %v1498
        %v1530 = vadd.f32 %v1529, %v1499
        %v1531 = vadd.f32 %v1530, %v1500
        %v1532 = vadd.f32 %v1531, %v1501
        %v1533 = vadd.f32 %v1532, %v1502
        %1534 = vadd.xlane.f32.xlu0 %v1533
        %v1535 = vpop.xlane.xlu0 %1534
        %v1536 = vadd.f32 %v1503, %v1504
        %v1537 = vadd.f32 %v1536, %v1505
        %v1538 = vadd.f32 %v1537, %v1506
        %v1539 = vadd.f32 %v1538, %v1507
        %v1540 = vadd.f32 %v1539, %v1508
        %v1541 = vadd.f32 %v1540, %v1509
        %v1542 = vadd.f32 %v1541, %v1510
        %v1543 = vadd.f32 %v1542, %v1511
        %v1544 = vadd.f32 %v1543, %v1512
        %v1545 = vadd.f32 %v1544, %v1513
        %v1546 = vadd.f32 %v1545, %v1514
        %v1547 = vadd.f32 %v1546, %v1515
        %v1548 = vadd.f32 %v1547, %v1516
        %v1549 = vadd.f32 %v1548, %v1517
        %v1550 = vadd.f32 %v1549, %v1518
        %1551 = vadd.xlane.f32.xlu0 %v1550
        %v1552 = vpop.xlane.xlu0 %1551
        %v1553 = vadd.f32 %v1485, %v1535
        %v1554 = vadd.f32 %v1486, %v1552
        %1555 = vst.msk [vmem:[#allocation3] sm:$0xff] %vm1482, %v1553
        %1556 = vst.msk [vmem:[#allocation3 + $0x8] sm:$0xff] %vm1482, %v1554
        %p1557 = scmp.eq.s32.totalorder %s25, 3
        // Predicated region
        $region49: #{tpu_custom_call.1} parent=35 // pred_check
          %p1558 = pneg %p1557
        $region50: #{tpu_custom_call.1} parent=35 // pred_check_branch
          %1560 = sbr.rel (%p1558) target = $region52
        $region51: #{tpu_custom_call.1} parent=35 // pred_region
          %v1561 = vld [vmem:[#allocation2] sm:$0xff]
          %v1562 = vld [vmem:[#allocation2 + $0x8] sm:$0xff]
          %v1563 = vmul.f32 %v1561, 0.00012207031
          %v1564 = vmul.f32 %v1562, 0.00012207031
          %v1565 = vld [vmem:[#allocation3] sm:$0xff]
          %v1566 = vld [vmem:[#allocation3 + $0x8] sm:$0xff]
          %v1567 = vmul.f32 %v1565, 0.00012207031
          %v1568 = vmul.f32 %v1566, 0.00012207031
          %v1569 = vmul.f32 %v1563, %v1563
          %v1570 = vmul.f32 %v1564, %v1564
          %v1571 = vsub.f32 %v1567, %v1569
          %v1572 = vsub.f32 %v1568, %v1570
          %v1573 = vld [vmem:[%s2] sm:$0xff]
          %v1574 = vld [vmem:[%s2 + $0x8] sm:$0xff]
          %v1575 = vadd.f32 %v1571, 1e-05
          %v1576 = vadd.f32 %v1572, 1e-05
          %v1577 = vrsqrt.pop %v1575
          %v1578 = vrsqrt.pop %v1576
          %v1579 = vmul.f32 %v1573, %v1577
          %v1580 = vmul.f32 %v1574, %v1578
          %1581 = vst.msk [vmem:[%s5] sm:$0xff] %vm1482, %v1579
          %1582 = vst.msk [vmem:[%s5 + $0x8] sm:$0xff] %vm1482, %v1580
          %v1583 = vld [vmem:[%s3] sm:$0xff]
          %v1584 = vld [vmem:[%s3 + $0x8] sm:$0xff]
          %v1585 = vmul.f32 %v1563, %v1579
          %v1586 = vmul.f32 %v1564, %v1580
          %v1587 = vsub.f32 %v1583, %v1585
          %v1588 = vsub.f32 %v1584, %v1586
          %1589 = vst.msk [vmem:[%s6] sm:$0xff] %vm1482, %v1587
          %1590 = vst.msk [vmem:[%s6 + $0x8] sm:$0xff] %vm1482, %v1588
        $region52: #{tpu_custom_call.1} parent=35 // pred_fallthru
          _
        %s1591 = sand.u32 %s122, 1
        %s1592 = scalar_lea.sflag [#allocation6], %s1591
        %s1593 = sand.u32 %s122, 1
        %s1594 = smul.addr %s1593, 256
        %s1595 = scalar_lea.vmem [#allocation9], %s1594
        // Predicated region
        $region53: #{tpu_custom_call.1} parent=35 // pred_check
          %p1596 = pneg %p132
        $region54: #{tpu_custom_call.1} parent=35 // pred_check_branch
          %1598 = sbr.rel (%p1596) target = $region56
        $region55: #{tpu_custom_call.1} parent=35 // pred_region
          %s1599 = smul.u32 16, %s25
          %s1601 = ssub.s32 4096, 4096
          %1602 = vsyncadd %s1592, %s1601
          %s1603 = smul.addr %s1599, 128
          %s1604 = scalar_lea.hbm %s4, %s1603
          %s1605 = sshll.u32 %s1595, 4
          %s1606 = int_to_ptr.vmem [resolvable:$true] %s1605
          %1611 = dma.vmem_to_hbm [thread:$0]  %s1606, 4096, %s1604, %s1592, 2048, 8192, 128
        $region56: #{tpu_custom_call.1} parent=35 // pred_fallthru
          _
        // Predicated region
        $region57: #{tpu_custom_call.1} parent=35 // pred_check
          %p1612 = pneg %p153
        $region58: #{tpu_custom_call.1} parent=35 // pred_check_branch
          %1614 = sbr.rel (%p1612) target = $region60
        $region59: #{tpu_custom_call.1} parent=35 // pred_region
          _
        $region60: #{tpu_custom_call.1} parent=35 // pred_fallthru
          _
        // Predicated region
        $region61: #{tpu_custom_call.1} parent=35 // pred_check
          %p1615 = pneg %p174
        $region62: #{tpu_custom_call.1} parent=35 // pred_check_branch
          %1617 = sbr.rel (%p1615) target = $region64
        $region63: #{tpu_custom_call.1} parent=35 // pred_region
          _
        $region64: #{tpu_custom_call.1} parent=35 // pred_fallthru
          _
        // Predicated region
        $region65: #{tpu_custom_call.1} parent=35 // pred_check
          %p1618 = pneg %p153
        $region66: #{tpu_custom_call.1} parent=35 // pred_check_branch
          %1620 = sbr.rel (%p1618) target = $region68
        $region67: #{tpu_custom_call.1} parent=35 // pred_region
          _
        $region68: #{tpu_custom_call.1} parent=35 // pred_fallthru
          _
        // Predicated region
        $region69: #{tpu_custom_call.1} parent=35 // pred_check
          %p1621 = pneg %p174
        $region70: #{tpu_custom_call.1} parent=35 // pred_check_branch
          %1623 = sbr.rel (%p1621) target = $region72
        $region71: #{tpu_custom_call.1} parent=35 // pred_region
          _
        $region72: #{tpu_custom_call.1} parent=35 // pred_fallthru
          _
      $region36: #{tpu_custom_call.1} parent=5 // pred_fallthru
        _
      %p1624 = scmp.le.s32.totalorder 2, %s20
      // Predicated region
      $region73: #{tpu_custom_call.1} parent=5 // pred_check
        %p1625 = pneg %p1624
      $region74: #{tpu_custom_call.1} parent=5 // pred_check_branch
        %1627 = sbr.rel (%p1625) target = $region76
      $region75: #{tpu_custom_call.1} parent=5 // pred_region
        %s1628 = ssub.s32 %s20, 2
        // Predicated region
        $region77: #{tpu_custom_call.1} parent=75 // pred_check
          %p1629 = pneg %p138
        $region78: #{tpu_custom_call.1} parent=75 // pred_check_branch
          %1631 = sbr.rel (%p1629) target = $region80
        $region79: #{tpu_custom_call.1} parent=75 // pred_region
          %s1632 = sand.u32 %s123, 1
          %s1633 = scalar_lea.sflag [#allocation6], %s1632
          %s1634 = sand.u32 %s123, 1
          %s1635 = smul.addr %s1634, 256
          %s1636 = scalar_lea.vmem [#allocation9], %s1635
          %1637 = dma.done %s1633, 4096
        $region80: #{tpu_custom_call.1} parent=75 // pred_fallthru
          _
      $region76: #{tpu_custom_call.1} parent=5 // pred_fallthru
        _
    $region6: #{tpu_custom_call.1} parent=1 // loop_footer
      %s24 = sadd.s32 1, %s20
    $region7: #{tpu_custom_call.1} parent=1 // loop_footer_branch
      %19 = sbr.rel target = $region3
    $region8: #{tpu_custom_call.1} parent=1 // loop_exit
      _
    %1638 = vsyncpa [#allocation5], 1
    %s1639 = scalar_lea.sflag [#allocation5], 1
    %1640 = vsyncpa %s1639, 1
    %1641 = vsyncpa [#allocation8], 1
    %s1642 = scalar_lea.sflag [#allocation8], 1
    %1643 = vsyncpa %s1642, 1
    %1644 = vsyncpa [#allocation6], 1
    %s1645 = scalar_lea.sflag [#allocation6], 1
    %1646 = vsyncpa %s1645, 1

</llo_original>
